<compile_context>
chip_gen: v6e
topology: v6e:2x2x1
jax: 0.10.0
libtpu: 0.0.40
codegen_flags: <defaults>
</compile_context>

<pallas_src>
import math
from functools import partial
from types import SimpleNamespace

import jax
import jax.numpy as jnp
from jax.experimental import pallas as pl
from jax.experimental.pallas import tpu as pltpu

LANE = 128                       # lane-pad unit for each output head
_ROW_TILE_BYTES = 2 * 1024 * 1024  # f32 accumulator/output row-tile budget


def _round_up(x, m):
    return ((x + m - 1) // m) * m


def _device_params():
    """Generation-aware knobs (tile policy + VMEM budget)."""
    try:
        kind = jax.devices()[0].device_kind.lower()
    except Exception:  # pragma: no cover - defensive
        kind = ""
    if "v5" in kind:
        # 4x128^2 MXU, 128 MiB VMEM, slowest HBM -> single row tile, roomy VMEM.
        return dict(vmem_limit_bytes=48 * 1024 * 1024, want_row_tiles=1)
    if "v6" in kind:
        # 2x256^2 MXU, 128 MiB VMEM.
        return dict(vmem_limit_bytes=64 * 1024 * 1024, want_row_tiles=1)
    if "v7" in kind or "7x" in kind:
        # 64 MiB physical VMEM + 2 TensorCores: tighter budget, spatial tiles.
        return dict(vmem_limit_bytes=36 * 1024 * 1024, want_row_tiles=2)
    return dict(vmem_limit_bytes=48 * 1024 * 1024, want_row_tiles=1)


def _pick_row_tile(H, W, cfull, want_tiles):
    """Largest divisor of H whose f32 row-tile fits the budget; prefer enough
    tiles to feed both v7x TensorCores, but never degrade to sub-4-row tiles."""
    divs = [th for th in range(1, H + 1)
            if H % th == 0 and th * W * cfull * 4 <= _ROW_TILE_BYTES]
    if not divs:
        return 1
    good = [th for th in divs if H // th >= want_tiles and (th >= 4 or th == H)]
    return max(good) if good else max(divs)


# -----------------------------------------------------------------------------
# Pallas kernel: fused cls+reg 3x3 conv, dx taps folded into K, one
# (batch, row-tile) per grid step.
# -----------------------------------------------------------------------------
def conv3x3_fused_kernel(x_ref, w_ref, b_ref, o_cls_ref, o_reg_ref):
    # x_ref:     (1, H+2, W, 3*Cin)  bf16  (im2col over dx, 1-row halo over dy)
    # w_ref:     (3, 3*Cin, Cfull)   bf16  (Cfull = cls_pad + reg_pad)
    # b_ref:     (1, Cfull)          f32
    # o_cls_ref: (1, TH, W, cls_pad) f32
    # o_reg_ref: (1, TH, W, reg_pad) f32
    TH = o_cls_ref.shape[1]
    cls_pad = o_cls_ref.shape[3]
    h0 = pl.multiple_of(pl.program_id(1) * TH, TH)

    def tap(dy):
        # Outer-axis (H) slice only -> no sublane relayout.
        lhs = x_ref[0, pl.ds(h0 + dy, TH), :, :]            # (TH, W, 3*Cin)
        return jax.lax.dot_general(
            lhs, w_ref[dy],
            dimension_numbers=(((2,), (0,)), ((), ())),
            preferred_element_type=jnp.float32)             # K = 3*Cin

    acc = tap(0)                 # dy == 0 initializes (no zero slab)
    acc = acc + tap(1)
    acc = acc + tap(2)
    acc = acc + b_ref[0][None, None, :]
    # Lane-aligned split (cls_pad is a multiple of 128): no relayout.
    o_cls_ref[0] = acc[..., :cls_pad].astype(o_cls_ref.dtype)
    o_reg_ref[0] = acc[..., cls_pad:].astype(o_reg_ref.dtype)


def conv3x3_fused(x_im2col, w_packed, b_packed, *, cls_pad, reg_pad):
    """Fused-head 3x3 conv (stride 1, pad 1) on a dx-im2col'd NHWC feature map.

    x_im2col: (B, H+2, W, 3*Cin) bf16
    w_packed: (3, 3*Cin, cls_pad + reg_pad) bf16
    b_packed: (1, cls_pad + reg_pad) f32
    returns   ((B, H, W, cls_pad) f32, (B, H, W, reg_pad) f32)
    """
    B, Hp, W, K3 = x_im2col.shape
    H = Hp - 2
    cfull = w_packed.shape[2]
    assert cfull == cls_pad + reg_pad and cls_pad % LANE == 0 and reg_pad % LANE == 0

    params = _device_params()
    TH = _pick_row_tile(H, W, cfull, params["want_row_tiles"])
    n_h = H // TH

    flops = 2 * B * H * W * cfull * 3 * K3            # == 2*B*H*W*Cout_pad*9*Cin
    bytes_accessed = (x_im2col.size * 2 + w_packed.size * 2 + b_packed.size * 4
                      + B * H * W * cfull * 4)

    return pl.pallas_call(
        conv3x3_fused_kernel,
        out_shape=(jax.ShapeDtypeStruct((B, H, W, cls_pad), jnp.float32),
                   jax.ShapeDtypeStruct((B, H, W, reg_pad), jnp.float32)),
        grid_spec=pltpu.PrefetchScalarGridSpec(
            num_scalar_prefetch=0,
            grid=(B, n_h),
            in_specs=[
                # feature block is invariant along h -> DMA'd once per batch,
                # stays VMEM-resident while output row-tiles pipeline.
                pl.BlockSpec((1, Hp, W, K3), lambda b, h: (b, 0, 0, 0)),
                pl.BlockSpec((3, K3, cfull), lambda b, h: (0, 0, 0)),
                pl.BlockSpec((1, cfull), lambda b, h: (0, 0)),
            ],
            out_specs=[
                pl.BlockSpec((1, TH, W, cls_pad), lambda b, h: (b, h, 0, 0)),
                pl.BlockSpec((1, TH, W, reg_pad), lambda b, h: (b, h, 0, 0)),
            ],
        ),
        compiler_params=pltpu.CompilerParams(
            dimension_semantics=("parallel", "parallel"),
            vmem_limit_bytes=params["vmem_limit_bytes"],
        ),
        cost_estimate=pl.CostEstimate(
            flops=flops, transcendentals=0, bytes_accessed=bytes_accessed),
    )(x_im2col, w_packed, b_packed)


# -----------------------------------------------------------------------------
# Per-level forward.  The NCHW->NHWC transpose, halo pad, dx-im2col and bf16
# cast all fuse into a single XLA pass under jit (one read of the NCHW feature,
# one write of the kernel-ready buffer).
# TODO(synk): keep backbone features NHWC end-to-end to drop the transpose pass
#             entirely (input contract here is NCHW to match the PyTorch spec).
# -----------------------------------------------------------------------------
@partial(jax.jit, static_argnames=("cls_out", "reg_out"))
def _level_forward(feat_nchw, w_packed, b_packed, *, cls_out, reg_out):
    B, Cin, H, W = feat_nchw.shape
    cls_pad = _round_up(cls_out, LANE)
    reg_pad = w_packed.shape[2] - cls_pad

    x = jnp.transpose(feat_nchw, (0, 2, 3, 1)).astype(jnp.bfloat16)   # NHWC bf16
    xp = jnp.pad(x, ((0, 0), (1, 1), (1, 1), (0, 0)))                 # halo
    # im2col over dx: (B, H+2, W, 3, Cin) -> (B, H+2, W, 3*Cin)
    cols = jnp.stack([xp[:, :, dx:dx + W, :] for dx in range(3)], axis=3)
    x_im2col = cols.reshape(B, H + 2, W, 3 * Cin)

    out_cls, out_reg = conv3x3_fused(x_im2col, w_packed, b_packed,
                                     cls_pad=cls_pad, reg_pad=reg_pad)
    # Trailing-lane drop + flatten == permute(0,2,3,1).contiguous().view(B,-1)
    c = out_cls[..., :cls_out].reshape(B, -1)
    r = out_reg[..., :reg_out].reshape(B, -1)
    return c, r


# -----------------------------------------------------------------------------
# BoxPredictor
# -----------------------------------------------------------------------------
def xavier_uniform(key, shape):
    # shape: (Cout, Cin, kh, kw) -- matches nn.init.xavier_uniform_ semantics
    cout, cin, kh, kw = shape
    fan_in = cin * kh * kw
    fan_out = cout * kh * kw
    bound = math.sqrt(6.0 / (fan_in + fan_out))
    return jax.random.uniform(key, shape, jnp.float32, -bound, bound)


class BoxPredictor:
    def __init__(self, cfg, key):
        self.cfg = cfg
        self.num_classes = cfg.MODEL.NUM_CLASSES
        self.levels = []
        keys = jax.random.split(key, 2 * len(cfg.MODEL.PRIORS.BOXES_PER_LOCATION))
        for level, (bpl, oc) in enumerate(zip(cfg.MODEL.PRIORS.BOXES_PER_LOCATION,
                                              cfg.MODEL.BACKBONE.OUT_CHANNELS)):
            cls_out = bpl * self.num_classes
            reg_out = bpl * 4
            w_cls = xavier_uniform(keys[2 * level], (cls_out, oc, 3, 3))
            b_cls = jnp.zeros((cls_out,), jnp.float32)
            w_reg = xavier_uniform(keys[2 * level + 1], (reg_out, oc, 3, 3))
            b_reg = jnp.zeros((reg_out,), jnp.float32)

            # --- pack ONCE: [cls | reg] sections each lane-padded to 128, so the
            #     in-kernel split lands on a 128-lane boundary.  Pad weights AND
            #     bias with zeros (pad lanes are sliced off before returning).
            cls_pad = _round_up(cls_out, LANE)
            reg_pad = _round_up(reg_out, LANE)
            cfull = cls_pad + reg_pad
            w_fused = jnp.zeros((cfull, oc, 3, 3), jnp.float32)
            w_fused = w_fused.at[:cls_out].set(w_cls)
            w_fused = w_fused.at[cls_pad:cls_pad + reg_out].set(w_reg)
            b_fused = jnp.zeros((cfull,), jnp.float32)
            b_fused = b_fused.at[:cls_out].set(b_cls)
            b_fused = b_fused.at[cls_pad:cls_pad + reg_out].set(b_reg)

            # (Cout, Cin, dy, dx) -> (dy, dx, Cin, Cout) -> (3, 3*Cin, Cfull) bf16
            # so the K index is dx*Cin + c, matching the dx-im2col'd LHS.
            w_packed = jnp.transpose(w_fused, (2, 3, 1, 0)).reshape(
                3, 3 * oc, cfull).astype(jnp.bfloat16)
            b_packed = b_fused.reshape(1, cfull).astype(jnp.float32)

            self.levels.append(dict(
                cls_out=cls_out, reg_out=reg_out,
                w_packed=w_packed, b_packed=b_packed,
                raw=(w_cls, b_cls, w_reg, b_reg)))

    def __call__(self, features_nchw):
        # TODO(synk): fuse the 2-3 smallest pyramid levels into a single
        #             pallas_call to amortize fixed launch/pipeline-ramp cost.
        batch_size = features_nchw[0].shape[0]
        cls_chunks, reg_chunks = [], []
        for feat, lv in zip(features_nchw, self.levels):
            c, r = _level_forward(feat, lv["w_packed"], lv["b_packed"],
                                  cls_out=lv["cls_out"], reg_out=lv["reg_out"])
            cls_chunks.append(c)
            reg_chunks.append(r)
        cls_logits = jnp.concatenate(cls_chunks, axis=1).reshape(
            batch_size, -1, self.num_classes)
        bbox_pred = jnp.concatenate(reg_chunks, axis=1).reshape(batch_size, -1, 4)
        return cls_logits, bbox_pred


# -----------------------------------------------------------------------------
# Pure-JAX reference (same bf16-rounded operands -> exact products, f32 accum)
# -----------------------------------------------------------------------------
def conv3x3_ref(x_nhwc_f32, w_oihw_f32, bias):
    w_hwio = jnp.transpose(w_oihw_f32, (2, 3, 1, 0))
    out = jax.lax.conv_general_dilated(
        x_nhwc_f32, w_hwio, window_strides=(1, 1), padding="SAME",
        dimension_numbers=("NHWC", "HWIO", "NHWC"),
        precision=jax.lax.Precision.HIGHEST)
    return out + bias[None, None, None, :]


if __name__ == "__main__":
    cfg = SimpleNamespace(
        MODEL=SimpleNamespace(
            NUM_CLASSES=3,
            PRIORS=SimpleNamespace(BOXES_PER_LOCATION=[4, 6]),
            BACKBONE=SimpleNamespace(OUT_CHANNELS=[4, 8]),
        )
    )

    key = jax.random.PRNGKey(0)
    k_params, k_f0, k_f1 = jax.random.split(key, 3)

    predictor = BoxPredictor(cfg, k_params)

    # feature maps in NCHW (PyTorch convention)
    features = [
        jax.random.normal(k_f0, (2, 4, 16, 16), jnp.float32),
        jax.random.normal(k_f1, (2, 8, 8, 8), jnp.float32),
    ]

    cls_logits, bbox_pred = predictor(features)
    cls_logits = jax.block_until_ready(cls_logits)
    bbox_pred = jax.block_until_ready(bbox_pred)

    # expected anchors: 16*16*4 + 8*8*6 = 1408
    assert cls_logits.shape == (2, 1408, 3), cls_logits.shape
    assert bbox_pred.shape == (2, 1408, 4), bbox_pred.shape

    # reference check (bf16-rounded inputs/weights, f32 math -> identical products)
    ref_cls, ref_reg = [], []
    for feat, lv in zip(features, predictor.levels):
        w_c, b_c, w_r, b_r = lv["raw"]
        x = jnp.transpose(feat, (0, 2, 3, 1)).astype(jnp.bfloat16).astype(jnp.float32)
        w_cq = w_c.astype(jnp.bfloat16).astype(jnp.float32)
        w_rq = w_r.astype(jnp.bfloat16).astype(jnp.float32)
        ref_cls.append(conv3x3_ref(x, w_cq, b_c).reshape(2, -1))
        ref_reg.append(conv3x3_ref(x, w_rq, b_r).reshape(2, -1))
    ref_cls = jnp.concatenate(ref_cls, axis=1).reshape(2, -1, 3)
    ref_reg = jnp.concatenate(ref_reg, axis=1).reshape(2, -1, 4)

    assert jnp.allclose(cls_logits, ref_cls, atol=1e-3, rtol=1e-3), (
        float(jnp.max(jnp.abs(cls_logits - ref_cls))))
    assert jnp.allclose(bbox_pred, ref_reg, atol=1e-3, rtol=1e-3), (
        float(jnp.max(jnp.abs(bbox_pred - ref_reg))))

    print("KERNEL_OK")
</pallas_src>

<mosaic_0001>
module attributes {stable_mosaic.version = 11 : i64} {
  func.func @conv3x3_fused_kernel(%arg0: i32, %arg1: i32, %arg2: memref<1x18x16x12xbf16, #tpu.memory_space<vmem>>, %arg3: memref<3x12x256xbf16, #tpu.memory_space<vmem>>, %arg4: memref<1x256xf32, #tpu.memory_space<vmem>>, %arg5: memref<1x16x16x128xf32, #tpu.memory_space<vmem>>, %arg6: memref<1x16x16x128xf32, #tpu.memory_space<vmem>>) attributes {dimension_semantics = [#tpu.dimension_semantics<parallel>, #tpu.dimension_semantics<parallel>], iteration_bounds = array<i64: 2, 1>, scalar_prefetch = 0 : i64, scratch_operands = 0 : i64, tpu.core_type = #tpu.core_type<tc>, window_params = [{transform_indices = @transform_0, window_bounds = array<i64: 1, 18, 16, 12>}, {pipeline_mode = #tpu.pipeline_mode<synchronous>, transform_indices = @transform_1, window_bounds = array<i64: 3, 12, 256>}, {pipeline_mode = #tpu.pipeline_mode<synchronous>, transform_indices = @transform_2, window_bounds = array<i64: 1, 256>}, {transform_indices = @transform_3, window_bounds = array<i64: 1, 16, 16, 128>}, {transform_indices = @transform_4, window_bounds = array<i64: 1, 16, 16, 128>}]} {
    %c16_i32 = arith.constant 16 : i32
    %0 = arith.muli %arg1, %c16_i32 : i32
    %1 = tpu.assume_multiple %0, 16 : i32
    %c0_i32 = arith.constant 0 : i32
    %2 = arith.addi %1, %c0_i32 : i32
    %c0 = arith.constant 0 : index
    %3 = arith.index_cast %2 : i32 to index
    %c0_0 = arith.constant 0 : index
    %c0_1 = arith.constant 0 : index
    %4 = vector.load %arg2[%c0, %3, %c0_0, %c0_1] : memref<1x18x16x12xbf16, #tpu.memory_space<vmem>>, vector<1x16x16x12xbf16>
    %5 = vector.shape_cast %4 : vector<1x16x16x12xbf16> to vector<16x16x12xbf16>
    %c0_2 = arith.constant 0 : index
    %c0_3 = arith.constant 0 : index
    %c0_4 = arith.constant 0 : index
    %6 = vector.load %arg3[%c0_2, %c0_3, %c0_4] : memref<3x12x256xbf16, #tpu.memory_space<vmem>>, vector<1x12x256xbf16>
    %7 = vector.shape_cast %6 : vector<1x12x256xbf16> to vector<12x256xbf16>
    %cst = arith.constant dense<0.000000e+00> : vector<16x16x256xf32>
    %8 = tpu.matmul %5, %7, %cst {dimension_numbers = #tpu.dot_dimension_numbers<[2], [0], [0, 1], [1], [0, 0, 0, 1, 1, 1], [], []>} : vector<16x16x12xbf16>, vector<12x256xbf16>, vector<16x16x256xf32> -> vector<16x16x256xf32>
    %c1_i32 = arith.constant 1 : i32
    %9 = arith.addi %1, %c1_i32 : i32
    %c0_5 = arith.constant 0 : index
    %10 = arith.index_cast %9 : i32 to index
    %c0_6 = arith.constant 0 : index
    %c0_7 = arith.constant 0 : index
    %11 = vector.load %arg2[%c0_5, %10, %c0_6, %c0_7] : memref<1x18x16x12xbf16, #tpu.memory_space<vmem>>, vector<1x16x16x12xbf16>
    %12 = vector.shape_cast %11 : vector<1x16x16x12xbf16> to vector<16x16x12xbf16>
    %c1 = arith.constant 1 : index
    %c0_8 = arith.constant 0 : index
    %c0_9 = arith.constant 0 : index
    %13 = vector.load %arg3[%c1, %c0_8, %c0_9] : memref<3x12x256xbf16, #tpu.memory_space<vmem>>, vector<1x12x256xbf16>
    %14 = vector.shape_cast %13 : vector<1x12x256xbf16> to vector<12x256xbf16>
    %cst_10 = arith.constant dense<0.000000e+00> : vector<16x16x256xf32>
    %15 = tpu.matmul %12, %14, %cst_10 {dimension_numbers = #tpu.dot_dimension_numbers<[2], [0], [0, 1], [1], [0, 0, 0, 1, 1, 1], [], []>} : vector<16x16x12xbf16>, vector<12x256xbf16>, vector<16x16x256xf32> -> vector<16x16x256xf32>
    %16 = arith.addf %8, %15 : vector<16x16x256xf32>
    %c2_i32 = arith.constant 2 : i32
    %17 = arith.addi %1, %c2_i32 : i32
    %c0_11 = arith.constant 0 : index
    %18 = arith.index_cast %17 : i32 to index
    %c0_12 = arith.constant 0 : index
    %c0_13 = arith.constant 0 : index
    %19 = vector.load %arg2[%c0_11, %18, %c0_12, %c0_13] : memref<1x18x16x12xbf16, #tpu.memory_space<vmem>>, vector<1x16x16x12xbf16>
    %20 = vector.shape_cast %19 : vector<1x16x16x12xbf16> to vector<16x16x12xbf16>
    %c2 = arith.constant 2 : index
    %c0_14 = arith.constant 0 : index
    %c0_15 = arith.constant 0 : index
    %21 = vector.load %arg3[%c2, %c0_14, %c0_15] : memref<3x12x256xbf16, #tpu.memory_space<vmem>>, vector<1x12x256xbf16>
    %22 = vector.shape_cast %21 : vector<1x12x256xbf16> to vector<12x256xbf16>
    %cst_16 = arith.constant dense<0.000000e+00> : vector<16x16x256xf32>
    %23 = tpu.matmul %20, %22, %cst_16 {dimension_numbers = #tpu.dot_dimension_numbers<[2], [0], [0, 1], [1], [0, 0, 0, 1, 1, 1], [], []>} : vector<16x16x12xbf16>, vector<12x256xbf16>, vector<16x16x256xf32> -> vector<16x16x256xf32>
    %24 = arith.addf %16, %23 : vector<16x16x256xf32>
    %c0_17 = arith.constant 0 : index
    %c0_18 = arith.constant 0 : index
    %25 = vector.load %arg4[%c0_17, %c0_18] : memref<1x256xf32, #tpu.memory_space<vmem>>, vector<1x256xf32>
    %26 = vector.shape_cast %25 : vector<1x256xf32> to vector<256xf32>
    %27 = vector.shape_cast %26 : vector<256xf32> to vector<1x1x256xf32>
    %28 = vector.broadcast %27 : vector<1x1x256xf32> to vector<16x16x256xf32>
    %29 = arith.addf %24, %28 : vector<16x16x256xf32>
    %30 = vector.extract_strided_slice %29 {offsets = [0, 0, 0], sizes = [16, 16, 128], strides = [1, 1, 1]} : vector<16x16x256xf32> to vector<16x16x128xf32>
    %c0_19 = arith.constant 0 : index
    %c0_20 = arith.constant 0 : index
    %c0_21 = arith.constant 0 : index
    %c0_22 = arith.constant 0 : index
    %31 = vector.load %arg5[%c0_19, %c0_20, %c0_21, %c0_22] : memref<1x16x16x128xf32, #tpu.memory_space<vmem>>, vector<1x16x16x128xf32>
    %32 = vector.shape_cast %31 : vector<1x16x16x128xf32> to vector<16x16x128xf32>
    %33 = vector.shape_cast %30 : vector<16x16x128xf32> to vector<1x16x16x128xf32>
    tpu.vector_store %arg5[%c0_19, %c0_20, %c0_21, %c0_22], %33 {strides = array<i32>} : memref<1x16x16x128xf32, #tpu.memory_space<vmem>>, vector<1x16x16x128xf32>,
    %34 = vector.extract_strided_slice %29 {offsets = [0, 0, 128], sizes = [16, 16, 128], strides = [1, 1, 1]} : vector<16x16x256xf32> to vector<16x16x128xf32>
    %c0_23 = arith.constant 0 : index
    %c0_24 = arith.constant 0 : index
    %c0_25 = arith.constant 0 : index
    %c0_26 = arith.constant 0 : index
    %35 = vector.load %arg6[%c0_23, %c0_24, %c0_25, %c0_26] : memref<1x16x16x128xf32, #tpu.memory_space<vmem>>, vector<1x16x16x128xf32>
    %36 = vector.shape_cast %35 : vector<1x16x16x128xf32> to vector<16x16x128xf32>
    %37 = vector.shape_cast %34 : vector<16x16x128xf32> to vector<1x16x16x128xf32>
    tpu.vector_store %arg6[%c0_23, %c0_24, %c0_25, %c0_26], %37 {strides = array<i32>} : memref<1x16x16x128xf32, #tpu.memory_space<vmem>>, vector<1x16x16x128xf32>,
    return
  }
  func.func @transform_0(%arg0: i32, %arg1: i32) -> (i32, i32, i32, i32) {
    %c0_i32 = arith.constant 0 : i32
    %c0_i32_0 = arith.constant 0 : i32
    %c0_i32_1 = arith.constant 0 : i32
    %c0_i32_2 = arith.constant 0 : i32
    return %arg0, %c0_i32, %c0_i32_0, %c0_i32_1 : i32, i32, i32, i32
  }
  func.func @transform_1(%arg0: i32, %arg1: i32) -> (i32, i32, i32) {
    %c0_i32 = arith.constant 0 : i32
    %c0_i32_0 = arith.constant 0 : i32
    %c0_i32_1 = arith.constant 0 : i32
    %c0_i32_2 = arith.constant 0 : i32
    return %c0_i32, %c0_i32_0, %c0_i32_1 : i32, i32, i32
  }
  func.func @transform_2(%arg0: i32, %arg1: i32) -> (i32, i32) {
    %c0_i32 = arith.constant 0 : i32
    %c0_i32_0 = arith.constant 0 : i32
    %c0_i32_1 = arith.constant 0 : i32
    return %c0_i32, %c0_i32_0 : i32, i32
  }
  func.func @transform_3(%arg0: i32, %arg1: i32) -> (i32, i32, i32, i32) {
    %c0_i32 = arith.constant 0 : i32
    %c0_i32_0 = arith.constant 0 : i32
    %c0_i32_1 = arith.constant 0 : i32
    return %arg0, %arg1, %c0_i32, %c0_i32_0 : i32, i32, i32, i32
  }
  func.func @transform_4(%arg0: i32, %arg1: i32) -> (i32, i32, i32, i32) {
    %c0_i32 = arith.constant 0 : i32
    %c0_i32_0 = arith.constant 0 : i32
    %c0_i32_1 = arith.constant 0 : i32
    return %arg0, %arg1, %c0_i32, %c0_i32_0 : i32, i32, i32, i32
  }
}

</mosaic_0001>

<llo_original>
// kernel: _level_forward.1
$region0: #{_level_forward.1}
  #allocation0 [shape = 'u32[]', space=smem, size = 0x4, offset = 0x4, fixed_abs, tag = 'smem constant byte address 0x4 - core index']
  #allocation1 [shape = 'u32[144,128]{1,0:T(1,128)}', space=vmem, size = 0x12000, scoped, tag = 'internal scratch']
  %s0 = inlined_call_operand.vmem [shape: bf16[2,18,16,12], index: 0, kind: input, shape index: {}]
  %s1 = inlined_call_operand.vmem [shape: bf16[3,12,256], index: 1, kind: input, shape index: {}]
  %s2 = inlined_call_operand.vmem [shape: f32[1,256], index: 2, kind: input, shape index: {}]
  %s3 = inlined_call_operand.vmem [shape: f32[2,16,16,128], index: 3, kind: output, shape index: {0}]
  %s4 = inlined_call_operand.vmem [shape: f32[2,16,16,128], index: 4, kind: output, shape index: {1}]
  %5 = xla_tuple %s3, %s4
  %s6 = sld [smem:[#allocation0]]
  $region53: #{_level_forward.1} parent=0
    _
  %s8 = ssub.s32 1, %s6
  %s9 = scalar_select 0, %s8, %s6
  loop: start=0, step=1, limit=4
  $region2: #{_level_forward.1} parent=0 // loop_pre_header
    _
  $region3: #{_level_forward.1} parent=0 // loop_header
    %s11 = sphi 0, %s15
    %p12 = scmp.ge.s32.totalorder %s11, 4
    %s18 = sphi 0, %s30
    %s19 = sphi 0, %s26
    %s20 = sphi 0, %s18
    %s21 = sphi 0, %s19
    %s22 = sphi 0, %s20
    %s23 = sphi 0, %s21
    %s33 = sphi 0, %s35
    %s36 = sphi 0, %s33
    %s37 = sphi 0, %s36
    %s53 = sphi 0, %s37
    %s57 = sphi 0, %s57
    %s59 = sphi 0, %s57
    %s60 = sphi 0, %s59
    %s74 = sphi 0, %s60
    %s78 = sphi 0, %s78
    %s80 = sphi 0, %s78
    %s81 = sphi 0, %s80
    %s95 = sphi 0, %s81
    %s103 = sphi 0, %s105
    %s106 = sphi 0, %s103
    %s107 = sphi 0, %s106
    %s123 = sphi 0, %s107
    %s131 = sphi 0, %s133
    %s134 = sphi 0, %s131
    %s135 = sphi 0, %s134
    %s151 = sphi 0, %s135
  $region4: #{_level_forward.1} parent=0 // loop_header_branch
    %14 = sbr.rel (%p12) target = $region8
  $region5: #{_level_forward.1} parent=0 // loop_body
    %s16 = ssub.s32 %s11, 1
    %s17 = ssub.s32 %s11, 2
    %s24 = sadd.s32 1, %s19
    %p25 = scmp.ge.s32.totalorder %s24, 1
    %s26 = scalar_select %p25, 0, %s24
    %s27 = sadd.s32 1, %s18
    %s28 = scalar_select %p25, %s27, %s18
    %p29 = scmp.ge.s32.totalorder %s28, 2
    %s30 = scalar_select %p29, 0, %s28
    %s31 = ssub.s32 %s18, %s30
    %p32 = scmp.eq.s32.totalorder %s31, 0
    %s34 = sadd.s32 %s33, 1
    %s35 = scalar_select %p32, %s33, %s34
    %p38 = pneg %p32
    %p39 = scmp.eq.s32.totalorder %s11, 1
    %p40 = por %p38, %p39
    %p41 = scmp.ne.s32.totalorder %s33, %s36
    %p42 = scmp.eq.s32.totalorder %s11, 0
    %p43 = por %p41, %p42
    %p44 = scmp.ne.s32.totalorder %s33, %s36
    %p45 = scmp.eq.s32.totalorder %s16, 1
    %p46 = por %p44, %p45
    %p47 = scmp.ne.s32.totalorder %s36, %s37
    %p48 = scmp.eq.s32.totalorder %s16, 0
    %p49 = por %p47, %p48
    %p50 = scmp.ne.s32.totalorder %s36, %s37
    %p51 = scmp.eq.s32.totalorder %s17, 1
    %p52 = por %p50, %p51
    %p54 = scmp.ne.s32.totalorder %s37, %s53
    %p55 = scmp.eq.s32.totalorder %s17, 0
    %p56 = por %p54, %p55
    %s58 = sadd.s32 %s57, 1
    %p61 = scmp.eq.s32.totalorder %s11, 1
    %p62 = scmp.ne.s32.totalorder %s57, %s59
    %p63 = scmp.eq.s32.totalorder %s11, 0
    %p64 = por %p62, %p63
    %p65 = scmp.ne.s32.totalorder %s57, %s59
    %p66 = scmp.eq.s32.totalorder %s16, 1
    %p67 = por %p65, %p66
    %p68 = scmp.ne.s32.totalorder %s59, %s60
    %p69 = scmp.eq.s32.totalorder %s16, 0
    %p70 = por %p68, %p69
    %p71 = scmp.ne.s32.totalorder %s59, %s60
    %p72 = scmp.eq.s32.totalorder %s17, 1
    %p73 = por %p71, %p72
    %p75 = scmp.ne.s32.totalorder %s60, %s74
    %p76 = scmp.eq.s32.totalorder %s17, 0
    %p77 = por %p75, %p76
    %s79 = sadd.s32 %s78, 1
    %p82 = scmp.eq.s32.totalorder %s11, 1
    %p83 = scmp.ne.s32.totalorder %s78, %s80
    %p84 = scmp.eq.s32.totalorder %s11, 0
    %p85 = por %p83, %p84
    %p86 = scmp.ne.s32.totalorder %s78, %s80
    %p87 = scmp.eq.s32.totalorder %s16, 1
    %p88 = por %p86, %p87
    %p89 = scmp.ne.s32.totalorder %s80, %s81
    %p90 = scmp.eq.s32.totalorder %s16, 0
    %p91 = por %p89, %p90
    %p92 = scmp.ne.s32.totalorder %s80, %s81
    %p93 = scmp.eq.s32.totalorder %s17, 1
    %p94 = por %p92, %p93
    %p96 = scmp.ne.s32.totalorder %s81, %s95
    %p97 = scmp.eq.s32.totalorder %s17, 0
    %p98 = por %p96, %p97
    %s99 = ssub.s32 %s18, %s30
    %s100 = ssub.s32 %s19, %s26
    %s101 = sor.u32 %s99, %s100
    %p102 = scmp.eq.s32.totalorder %s101, 0
    %s104 = sadd.s32 %s103, 1
    %s105 = scalar_select %p102, %s103, %s104
    %p108 = pneg %p102
    %p109 = scmp.eq.s32.totalorder %s11, 1
    %p110 = por %p108, %p109
    %p111 = scmp.ne.s32.totalorder %s103, %s106
    %p112 = scmp.eq.s32.totalorder %s11, 0
    %p113 = por %p111, %p112
    %p114 = scmp.ne.s32.totalorder %s103, %s106
    %p115 = scmp.eq.s32.totalorder %s16, 1
    %p116 = por %p114, %p115
    %p117 = scmp.ne.s32.totalorder %s106, %s107
    %p118 = scmp.eq.s32.totalorder %s16, 0
    %p119 = por %p117, %p118
    %p120 = scmp.ne.s32.totalorder %s106, %s107
    %p121 = scmp.eq.s32.totalorder %s17, 1
    %p122 = por %p120, %p121
    %p124 = scmp.ne.s32.totalorder %s107, %s123
    %p125 = scmp.eq.s32.totalorder %s17, 0
    %p126 = por %p124, %p125
    %s127 = ssub.s32 %s18, %s30
    %s128 = ssub.s32 %s19, %s26
    %s129 = sor.u32 %s127, %s128
    %p130 = scmp.eq.s32.totalorder %s129, 0
    %s132 = sadd.s32 %s131, 1
    %s133 = scalar_select %p130, %s131, %s132
    %p136 = pneg %p130
    %p137 = scmp.eq.s32.totalorder %s11, 1
    %p138 = por %p136, %p137
    %p139 = scmp.ne.s32.totalorder %s131, %s134
    %p140 = scmp.eq.s32.totalorder %s11, 0
    %p141 = por %p139, %p140
    %p142 = scmp.ne.s32.totalorder %s131, %s134
    %p143 = scmp.eq.s32.totalorder %s16, 1
    %p144 = por %p142, %p143
    %p145 = scmp.ne.s32.totalorder %s134, %s135
    %p146 = scmp.eq.s32.totalorder %s16, 0
    %p147 = por %p145, %p146
    %p148 = scmp.ne.s32.totalorder %s134, %s135
    %p149 = scmp.eq.s32.totalorder %s17, 1
    %p150 = por %p148, %p149
    %p152 = scmp.ne.s32.totalorder %s135, %s151
    %p153 = scmp.eq.s32.totalorder %s17, 0
    %p154 = por %p152, %p153
    %p155 = scmp.le.s32.totalorder 1, %s11
    %p156 = scmp.lt.s32.totalorder %s11, 3
    %p157 = pnand %p155, %p156
    %p158 = pneg %p157
    // Predicated region
    $region9: #{_level_forward.1} parent=5 // pred_check
      _
    $region10: #{_level_forward.1} parent=5 // pred_check_branch
      %160 = sbr.rel (%p157) target = $region12
    $region11: #{_level_forward.1} parent=5 // pred_region
      %s161 = ssub.s32 %s11, 1
      // Predicated region
      $region13: #{_level_forward.1} parent=11 // pred_check
        %p162 = pneg %p70
      $region14: #{_level_forward.1} parent=11 // pred_check_branch
        %164 = sbr.rel (%p162) target = $region16
      $region15: #{_level_forward.1} parent=11 // pred_region
        _
      $region16: #{_level_forward.1} parent=11 // pred_fallthru
        _
      // Predicated region
      $region17: #{_level_forward.1} parent=11 // pred_check
        %p165 = pneg %p91
      $region18: #{_level_forward.1} parent=11 // pred_check_branch
        %167 = sbr.rel (%p165) target = $region20
      $region19: #{_level_forward.1} parent=11 // pred_region
        _
      $region20: #{_level_forward.1} parent=11 // pred_fallthru
        _
    $region12: #{_level_forward.1} parent=5 // pred_fallthru
      _
    %p168 = scmp.lt.s32.totalorder %s11, 2
    // Predicated region
    $region21: #{_level_forward.1} parent=5 // pred_check
      %p169 = pneg %p168
    $region22: #{_level_forward.1} parent=5 // pred_check_branch
      %171 = sbr.rel (%p169) target = $region24
    $region23: #{_level_forward.1} parent=5 // pred_region
      // Predicated region
      $region25: #{_level_forward.1} parent=23 // pred_check
        %p172 = pneg %p43
      $region26: #{_level_forward.1} parent=23 // pred_check_branch
        %174 = sbr.rel (%p172) target = $region28
      $region27: #{_level_forward.1} parent=23 // pred_region
        %p175 = scmp.lt.s32.totalorder %s18, 1
        %s176 = scalar_select %p175, %s18, 1
        %s177 = smul.addr %s176, 36
        %s178 = smul.addr %s177, 4
        %s179 = scalar_lea.vmem %s0, %s178
      $region28: #{_level_forward.1} parent=23 // pred_fallthru
        _
    $region24: #{_level_forward.1} parent=5 // pred_fallthru
      _
    %p180 = scmp.le.s32.totalorder 1, %s11
    %p181 = scmp.lt.s32.totalorder %s11, 3
    %p182 = pnand %p180, %p181
    %p183 = pneg %p182
    // Predicated region
    $region29: #{_level_forward.1} parent=5 // pred_check
      _
    $region30: #{_level_forward.1} parent=5 // pred_check_branch
      %185 = sbr.rel (%p182) target = $region32
    $region31: #{_level_forward.1} parent=5 // pred_region
      %s186 = ssub.s32 %s11, 1
      %p187 = scmp.lt.s32.totalorder %s20, 1
      %s188 = scalar_select %p187, %s20, 1
      %s189 = smul.addr %s188, 36
      %s190 = smul.addr %s189, 4
      %s191 = scalar_lea.vmem %s0, %s190
      %p192 = pneg %p49
      %p193 = pneg %p46
      %p194 = pneg %p70
      %p195 = pneg %p67
      %p196 = pneg %p91
      %p197 = pneg %p88
      %p198 = pneg %p119
      %p199 = pneg %p116
      %s200 = smul.u32 16, %s21
      %p201 = scmp.lt.s32.totalorder %s20, 1
      %s202 = scalar_select %p201, %s20, 1
      %p203 = scmp.lt.s32.totalorder %s200, 15
      %s204 = scalar_select %p203, %s200, 15
      %s205 = smul.addr %s204, 2
      %s206 = smul.addr %s202, 32
      %s207 = sadd.s32 %s205, %s206
      %s208 = smul.addr %s207, 8
      %s209 = scalar_lea.vmem %s3, %s208
      %p210 = pneg %p147
      %p211 = pneg %p144
      %s212 = smul.u32 16, %s21
      %p213 = scmp.lt.s32.totalorder %s20, 1
      %s214 = scalar_select %p213, %s20, 1
      %p215 = scmp.lt.s32.totalorder %s212, 15
      %s216 = scalar_select %p215, %s212, 15
      %s217 = smul.addr %s216, 2
      %s218 = smul.addr %s214, 32
      %s219 = sadd.s32 %s217, %s218
      %s220 = smul.addr %s219, 8
      %s221 = scalar_lea.vmem %s4, %s220
      %p222 = scmp.lt.s32.totalorder %s20, 1
      %s223 = scalar_select %p222, %s20, 1
      %s224 = smul.addr %s223, 36
      %s225 = smul.addr %s224, 4
      %s226 = scalar_lea.vmem %s0, %s225
      %s227 = smul.u32 16, %s21
      %p228 = scmp.lt.s32.totalorder %s20, 1
      %s229 = scalar_select %p228, %s20, 1
      %p230 = scmp.lt.s32.totalorder %s227, 15
      %s231 = scalar_select %p230, %s227, 15
      %s232 = smul.addr %s231, 2
      %s233 = smul.addr %s229, 32
      %s234 = sadd.s32 %s232, %s233
      %s235 = smul.addr %s234, 8
      %s236 = scalar_lea.vmem %s3, %s235
      %s237 = smul.u32 16, %s21
      %s238 = smul.u32 16, %s21
      %p239 = scmp.lt.s32.totalorder %s20, 1
      %s240 = scalar_select %p239, %s20, 1
      %p241 = scmp.lt.s32.totalorder %s238, 15
      %s242 = scalar_select %p241, %s238, 15
      %s243 = smul.addr %s242, 2
      %s244 = smul.addr %s240, 32
      %s245 = sadd.s32 %s243, %s244
      %s246 = smul.addr %s245, 8
      %s247 = scalar_lea.vmem %s4, %s246
      %s248 = smul.u32 16, %s21
      %s250 = smul.u32 %s21, 16
      %s251 = smul.u32 %s250, 2
      %s252 = smul.addr %s251, 4
      %s253 = scalar_lea.vmem %s226, %s252
      %v254 = vld [vmem:[%s253] sm:$0xf]
      %v255 = vld [vmem:[%s253 + $0x4] sm:$0xf]
      %v256 = vld [vmem:[%s253 + $0x8] sm:$0xf]
      %v257 = vld [vmem:[%s253 + $0xc] sm:$0xf]
      %v258 = vld [vmem:[%s253 + $0x10] sm:$0xf]
      %v259 = vld [vmem:[%s253 + $0x14] sm:$0xf]
      %v260 = vld [vmem:[%s253 + $0x18] sm:$0xf]
      %v261 = vld [vmem:[%s253 + $0x1c] sm:$0xf]
      %v262 = vld [vmem:[%s253 + $0x20] sm:$0xf]
      %v263 = vld [vmem:[%s253 + $0x24] sm:$0xf]
      %v264 = vld [vmem:[%s253 + $0x28] sm:$0xf]
      %v265 = vld [vmem:[%s253 + $0x2c] sm:$0xf]
      %v266 = vld [vmem:[%s253 + $0x30] sm:$0xf]
      %v267 = vld [vmem:[%s253 + $0x34] sm:$0xf]
      %v268 = vld [vmem:[%s253 + $0x38] sm:$0xf]
      %v269 = vld [vmem:[%s253 + $0x3c] sm:$0xf]
      %v270 = vld [vmem:[%s253 + $0x40] sm:$0xf]
      %v271 = vld [vmem:[%s253 + $0x44] sm:$0xf]
      %v272 = vld [vmem:[%s253 + $0x48] sm:$0xf]
      %v273 = vld [vmem:[%s253 + $0x4c] sm:$0xf]
      %v274 = vld [vmem:[%s253 + $0x50] sm:$0xf]
      %v275 = vld [vmem:[%s253 + $0x54] sm:$0xf]
      %v276 = vld [vmem:[%s253 + $0x58] sm:$0xf]
      %v277 = vld [vmem:[%s253 + $0x5c] sm:$0xf]
      %v278 = vld [vmem:[%s253 + $0x60] sm:$0xf]
      %v279 = vld [vmem:[%s253 + $0x64] sm:$0xf]
      %v280 = vld [vmem:[%s253 + $0x68] sm:$0xf]
      %v281 = vld [vmem:[%s253 + $0x6c] sm:$0xf]
      %v282 = vld [vmem:[%s253 + $0x70] sm:$0xf]
      %v283 = vld [vmem:[%s253 + $0x74] sm:$0xf]
      %v284 = vld [vmem:[%s253 + $0x78] sm:$0xf]
      %v285 = vld [vmem:[%s253 + $0x7c] sm:$0xf]
      %v286 = vld [vmem:[%s1] sm:$0xff]
      %v287 = vld [vmem:[%s1 + $0x8] sm:$0x33]
      %s288 = sadd.s32 %s250, 1
      %s289 = smul.u32 %s288, 2
      %s290 = smul.addr %s289, 4
      %s291 = scalar_lea.vmem %s226, %s290
      %v292 = vld [vmem:[%s291] sm:$0xf]
      %v293 = vld [vmem:[%s291 + $0x4] sm:$0xf]
      %v294 = vld [vmem:[%s291 + $0x8] sm:$0xf]
      %v295 = vld [vmem:[%s291 + $0xc] sm:$0xf]
      %v296 = vld [vmem:[%s291 + $0x10] sm:$0xf]
      %v297 = vld [vmem:[%s291 + $0x14] sm:$0xf]
      %v298 = vld [vmem:[%s291 + $0x18] sm:$0xf]
      %v299 = vld [vmem:[%s291 + $0x1c] sm:$0xf]
      %v300 = vld [vmem:[%s291 + $0x20] sm:$0xf]
      %v301 = vld [vmem:[%s291 + $0x24] sm:$0xf]
      %v302 = vld [vmem:[%s291 + $0x28] sm:$0xf]
      %v303 = vld [vmem:[%s291 + $0x2c] sm:$0xf]
      %v304 = vld [vmem:[%s291 + $0x30] sm:$0xf]
      %v305 = vld [vmem:[%s291 + $0x34] sm:$0xf]
      %v306 = vld [vmem:[%s291 + $0x38] sm:$0xf]
      %v307 = vld [vmem:[%s291 + $0x3c] sm:$0xf]
      %v308 = vld [vmem:[%s291 + $0x40] sm:$0xf]
      %v309 = vld [vmem:[%s291 + $0x44] sm:$0xf]
      %v310 = vld [vmem:[%s291 + $0x48] sm:$0xf]
      %v311 = vld [vmem:[%s291 + $0x4c] sm:$0xf]
      %v312 = vld [vmem:[%s291 + $0x50] sm:$0xf]
      %v313 = vld [vmem:[%s291 + $0x54] sm:$0xf]
      %v314 = vld [vmem:[%s291 + $0x58] sm:$0xf]
      %v315 = vld [vmem:[%s291 + $0x5c] sm:$0xf]
      %v316 = vld [vmem:[%s291 + $0x60] sm:$0xf]
      %v317 = vld [vmem:[%s291 + $0x64] sm:$0xf]
      %v318 = vld [vmem:[%s291 + $0x68] sm:$0xf]
      %v319 = vld [vmem:[%s291 + $0x6c] sm:$0xf]
      %v320 = vld [vmem:[%s291 + $0x70] sm:$0xf]
      %v321 = vld [vmem:[%s291 + $0x74] sm:$0xf]
      %v322 = vld [vmem:[%s291 + $0x78] sm:$0xf]
      %v323 = vld [vmem:[%s291 + $0x7c] sm:$0xf]
      %s324 = scalar_lea.vmem %s1, 16
      %v325 = vld [vmem:[%s324] sm:$0xff]
      %v326 = vld [vmem:[%s324 + $0x8] sm:$0x33]
      %v359 = vunpack.c.l.b16 %v292
      %v360 = vunpack.c.l.b16 %v293
      %v361 = vunpack.c.l.b16 %v294
      %v362 = vunpack.c.l.b16 %v295
      %v363 = vunpack.c.l.b16 %v296
      %v364 = vunpack.c.l.b16 %v297
      %v365 = vunpack.c.l.b16 %v298
      %v366 = vunpack.c.l.b16 %v299
      %v367 = vunpack.c.l.b16 %v300
      %v368 = vunpack.c.l.b16 %v301
      %v369 = vunpack.c.l.b16 %v302
      %v370 = vunpack.c.l.b16 %v303
      %v371 = vunpack.c.l.b16 %v304
      %v372 = vunpack.c.l.b16 %v305
      %v373 = vunpack.c.l.b16 %v306
      %v374 = vunpack.c.l.b16 %v307
      %v375 = vunpack.c.l.b16 %v308
      %v376 = vunpack.c.l.b16 %v309
      %v377 = vunpack.c.l.b16 %v310
      %v378 = vunpack.c.l.b16 %v311
      %v379 = vunpack.c.l.b16 %v312
      %v380 = vunpack.c.l.b16 %v313
      %v381 = vunpack.c.l.b16 %v314
      %v382 = vunpack.c.l.b16 %v315
      %v383 = vunpack.c.l.b16 %v316
      %v384 = vunpack.c.l.b16 %v317
      %v385 = vunpack.c.l.b16 %v318
      %v386 = vunpack.c.l.b16 %v319
      %v387 = vunpack.c.l.b16 %v320
      %v388 = vunpack.c.l.b16 %v321
      %v389 = vunpack.c.l.b16 %v322
      %v390 = vunpack.c.l.b16 %v323
      %v391 = vpack.c.b16 %v360, %v359
      %v392 = vpack.c.b16 %v362, %v361
      %v393 = vpack.c.b16 %v364, %v363
      %v394 = vpack.c.b16 %v366, %v365
      %v395 = vpack.c.b16 %v368, %v367
      %v396 = vpack.c.b16 %v370, %v369
      %v397 = vpack.c.b16 %v372, %v371
      %v398 = vpack.c.b16 %v374, %v373
      %v399 = vpack.c.b16 %v376, %v375
      %v400 = vpack.c.b16 %v378, %v377
      %v401 = vpack.c.b16 %v380, %v379
      %v402 = vpack.c.b16 %v382, %v381
      %v403 = vpack.c.b16 %v384, %v383
      %v404 = vpack.c.b16 %v386, %v385
      %v405 = vpack.c.b16 %v388, %v387
      %v406 = vpack.c.b16 %v390, %v389
      %v409 = vunpack.c.l.b16 %v325
      %v410 = vunpack.c.h.b16 %v325
      %v411 = vunpack.c.l.b16 %v326
      %v412 = vunpack.c.h.b16 %v326
      %v413 = vpack.c.b16 %v411, %v409
      %v414 = vpack.c.b16 %v412, %v410
      %vm415 = vcmask 97280
      %v417 = vsel %vm415, %v391, 0
      %v420 = vsel %vm415, %v392, 0
      %v423 = vsel %vm415, %v393, 0
      %v426 = vsel %vm415, %v394, 0
      %v429 = vsel %vm415, %v395, 0
      %v432 = vsel %vm415, %v396, 0
      %v435 = vsel %vm415, %v397, 0
      %v438 = vsel %vm415, %v398, 0
      %v441 = vsel %vm415, %v399, 0
      %v444 = vsel %vm415, %v400, 0
      %v447 = vsel %vm415, %v401, 0
      %v450 = vsel %vm415, %v402, 0
      %v453 = vsel %vm415, %v403, 0
      %v456 = vsel %vm415, %v404, 0
      %v459 = vsel %vm415, %v405, 0
      %v462 = vsel %vm415, %v406, 0
      %vm464 = vcmask 1045504
      %v466 = vsel %vm464, %v413, 0
      %v469 = vsel %vm464, %v414, 0
      %471 = vmatprep.subr.bf16.mxu0 0
      %472 = vmatpush1.bf16.msra.mxu0 0
      %473 = vmatprep.subr.bf16.mxu0 0
      %474 = vmatpush1.bf16.msra.mxu0 0
      %475 = vmatprep.subr.bf16.mxu0 0
      %476 = vmatpush1.bf16.msra.mxu0 0
      %477 = vmatprep.subr.bf16.mxu0 0
      %478 = vmatpush1.bf16.msra.mxu0 0
      %479 = vmatprep.subr.bf16.mxu0 0
      %480 = vmatpush1.bf16.msra.mxu0 0
      %481 = vmatprep.subr.bf16.mxu0 0
      %482 = vmatpush1.bf16.msra.mxu0 0
      %483 = vmatprep.subr.bf16.mxu0 0
      %484 = vmatpush1.bf16.msra.mxu0 0
      %485 = vmatprep.subr.bf16.mxu0 %v469
      %486 = vmatpush1.bf16.msra.mxu0 %v466
      %487 = vmatprep.subr.bf16.mxu0 0
      %488 = vmatpush2.bf16.msra.mxu0 0
      %489 = vmatprep.subr.bf16.mxu0 0
      %490 = vmatpush2.bf16.msra.mxu0 0
      %491 = vmatprep.subr.bf16.mxu0 0
      %492 = vmatpush2.bf16.msra.mxu0 0
      %493 = vmatprep.subr.bf16.mxu0 0
      %494 = vmatpush2.bf16.msra.mxu0 0
      %495 = vmatprep.subr.bf16.mxu0 0
      %496 = vmatpush2.bf16.msra.mxu0 0
      %497 = vmatprep.subr.bf16.mxu0 0
      %498 = vmatpush2.bf16.msra.mxu0 0
      %499 = vmatprep.subr.bf16.mxu0 0
      %500 = vmatpush2.bf16.msra.mxu0 0
      %501 = vmatprep.subr.bf16.mxu0 0
      %502 = vmatpush2.bf16.msra.mxu0 0
      %503 = vmatprep.mubr.bf16.mxu0 0
      %504 = vmatmul.mubr.bf16.gmra.mxu0 %v417
      %v505 = vpop.f32.mrf.mxu0
      %v506 = vadd.f32 0.0, %v505
      %v507 = vpop.f32.mrf.mxu0
      %v508 = vadd.f32 0.0, %v507
      %v509 = vpop.f32.mrf.mxu0
      %v510 = vadd.f32 0.0, %v509
      %v511 = vpop.f32.mrf.mxu0
      %v512 = vadd.f32 0.0, %v511
      %513 = vmatprep.mubr.bf16.mxu0 0
      %514 = vmatmul.mubr.bf16.gmra.mxu0 %v420
      %v515 = vpop.f32.mrf.mxu0
      %v516 = vadd.f32 0.0, %v515
      %v517 = vpop.f32.mrf.mxu0
      %v518 = vadd.f32 0.0, %v517
      %v519 = vpop.f32.mrf.mxu0
      %v520 = vadd.f32 0.0, %v519
      %v521 = vpop.f32.mrf.mxu0
      %v522 = vadd.f32 0.0, %v521
      %523 = vmatprep.mubr.bf16.mxu0 0
      %524 = vmatmul.mubr.bf16.gmra.mxu0 %v423
      %v525 = vpop.f32.mrf.mxu0
      %v526 = vadd.f32 0.0, %v525
      %v527 = vpop.f32.mrf.mxu0
      %v528 = vadd.f32 0.0, %v527
      %v529 = vpop.f32.mrf.mxu0
      %v530 = vadd.f32 0.0, %v529
      %v531 = vpop.f32.mrf.mxu0
      %v532 = vadd.f32 0.0, %v531
      %533 = vmatprep.mubr.bf16.mxu0 0
      %534 = vmatmul.mubr.bf16.gmra.mxu0 %v426
      %v535 = vpop.f32.mrf.mxu0
      %v536 = vadd.f32 0.0, %v535
      %v537 = vpop.f32.mrf.mxu0
      %v538 = vadd.f32 0.0, %v537
      %v539 = vpop.f32.mrf.mxu0
      %v540 = vadd.f32 0.0, %v539
      %v541 = vpop.f32.mrf.mxu0
      %v542 = vadd.f32 0.0, %v541
      %543 = vmatprep.mubr.bf16.mxu0 0
      %544 = vmatmul.mubr.bf16.gmra.mxu0 %v429
      %v545 = vpop.f32.mrf.mxu0
      %v546 = vadd.f32 0.0, %v545
      %v547 = vpop.f32.mrf.mxu0
      %v548 = vadd.f32 0.0, %v547
      %v549 = vpop.f32.mrf.mxu0
      %v550 = vadd.f32 0.0, %v549
      %v551 = vpop.f32.mrf.mxu0
      %v552 = vadd.f32 0.0, %v551
      %553 = vmatprep.mubr.bf16.mxu0 0
      %554 = vmatmul.mubr.bf16.gmra.mxu0 %v432
      %v555 = vpop.f32.mrf.mxu0
      %v556 = vadd.f32 0.0, %v555
      %v557 = vpop.f32.mrf.mxu0
      %v558 = vadd.f32 0.0, %v557
      %v559 = vpop.f32.mrf.mxu0
      %v560 = vadd.f32 0.0, %v559
      %v561 = vpop.f32.mrf.mxu0
      %v562 = vadd.f32 0.0, %v561
      %563 = vmatprep.mubr.bf16.mxu0 0
      %564 = vmatmul.mubr.bf16.gmra.mxu0 %v435
      %v565 = vpop.f32.mrf.mxu0
      %v566 = vadd.f32 0.0, %v565
      %v567 = vpop.f32.mrf.mxu0
      %v568 = vadd.f32 0.0, %v567
      %v569 = vpop.f32.mrf.mxu0
      %v570 = vadd.f32 0.0, %v569
      %v571 = vpop.f32.mrf.mxu0
      %v572 = vadd.f32 0.0, %v571
      %573 = vmatprep.mubr.bf16.mxu0 0
      %574 = vmatmul.mubr.bf16.gmra.mxu0 %v438
      %v575 = vpop.f32.mrf.mxu0
      %v576 = vadd.f32 0.0, %v575
      %v577 = vpop.f32.mrf.mxu0
      %v578 = vadd.f32 0.0, %v577
      %v579 = vpop.f32.mrf.mxu0
      %v580 = vadd.f32 0.0, %v579
      %v581 = vpop.f32.mrf.mxu0
      %v582 = vadd.f32 0.0, %v581
      %583 = vmatprep.mubr.bf16.mxu0 0
      %584 = vmatmul.mubr.bf16.gmra.mxu0 %v441
      %v585 = vpop.f32.mrf.mxu0
      %v586 = vadd.f32 0.0, %v585
      %v587 = vpop.f32.mrf.mxu0
      %v588 = vadd.f32 0.0, %v587
      %v589 = vpop.f32.mrf.mxu0
      %v590 = vadd.f32 0.0, %v589
      %v591 = vpop.f32.mrf.mxu0
      %v592 = vadd.f32 0.0, %v591
      %593 = vmatprep.mubr.bf16.mxu0 0
      %594 = vmatmul.mubr.bf16.gmra.mxu0 %v444
      %v595 = vpop.f32.mrf.mxu0
      %v596 = vadd.f32 0.0, %v595
      %v597 = vpop.f32.mrf.mxu0
      %v598 = vadd.f32 0.0, %v597
      %v599 = vpop.f32.mrf.mxu0
      %v600 = vadd.f32 0.0, %v599
      %v601 = vpop.f32.mrf.mxu0
      %v602 = vadd.f32 0.0, %v601
      %603 = vmatprep.mubr.bf16.mxu0 0
      %604 = vmatmul.mubr.bf16.gmra.mxu0 %v447
      %v605 = vpop.f32.mrf.mxu0
      %v606 = vadd.f32 0.0, %v605
      %v607 = vpop.f32.mrf.mxu0
      %v608 = vadd.f32 0.0, %v607
      %v609 = vpop.f32.mrf.mxu0
      %v610 = vadd.f32 0.0, %v609
      %v611 = vpop.f32.mrf.mxu0
      %v612 = vadd.f32 0.0, %v611
      %613 = vmatprep.mubr.bf16.mxu0 0
      %614 = vmatmul.mubr.bf16.gmra.mxu0 %v450
      %v615 = vpop.f32.mrf.mxu0
      %v616 = vadd.f32 0.0, %v615
      %v617 = vpop.f32.mrf.mxu0
      %v618 = vadd.f32 0.0, %v617
      %v619 = vpop.f32.mrf.mxu0
      %v620 = vadd.f32 0.0, %v619
      %v621 = vpop.f32.mrf.mxu0
      %v622 = vadd.f32 0.0, %v621
      %623 = vmatprep.mubr.bf16.mxu0 0
      %624 = vmatmul.mubr.bf16.gmra.mxu0 %v453
      %v625 = vpop.f32.mrf.mxu0
      %v626 = vadd.f32 0.0, %v625
      %v627 = vpop.f32.mrf.mxu0
      %v628 = vadd.f32 0.0, %v627
      %v629 = vpop.f32.mrf.mxu0
      %v630 = vadd.f32 0.0, %v629
      %v631 = vpop.f32.mrf.mxu0
      %v632 = vadd.f32 0.0, %v631
      %633 = vmatprep.mubr.bf16.mxu0 0
      %634 = vmatmul.mubr.bf16.gmra.mxu0 %v456
      %v635 = vpop.f32.mrf.mxu0
      %v636 = vadd.f32 0.0, %v635
      %v637 = vpop.f32.mrf.mxu0
      %v638 = vadd.f32 0.0, %v637
      %v639 = vpop.f32.mrf.mxu0
      %v640 = vadd.f32 0.0, %v639
      %v641 = vpop.f32.mrf.mxu0
      %v642 = vadd.f32 0.0, %v641
      %643 = vmatprep.mubr.bf16.mxu0 0
      %644 = vmatmul.mubr.bf16.gmra.mxu0 %v459
      %v645 = vpop.f32.mrf.mxu0
      %v646 = vadd.f32 0.0, %v645
      %v647 = vpop.f32.mrf.mxu0
      %v648 = vadd.f32 0.0, %v647
      %v649 = vpop.f32.mrf.mxu0
      %v650 = vadd.f32 0.0, %v649
      %v651 = vpop.f32.mrf.mxu0
      %v652 = vadd.f32 0.0, %v651
      %653 = vmatprep.mubr.bf16.mxu0 0
      %654 = vmatmul.mubr.bf16.gmra.mxu0 %v462
      %v655 = vpop.f32.mrf.mxu0
      %v656 = vadd.f32 0.0, %v655
      %v657 = vpop.f32.mrf.mxu0
      %v658 = vadd.f32 0.0, %v657
      %v659 = vpop.f32.mrf.mxu0
      %v660 = vadd.f32 0.0, %v659
      %v661 = vpop.f32.mrf.mxu0
      %v662 = vadd.f32 0.0, %v661
      %663 = vdwg.mxu0
      %v696 = vunpack.c.l.b16 %v254
      %v697 = vunpack.c.l.b16 %v255
      %v698 = vunpack.c.l.b16 %v256
      %v699 = vunpack.c.l.b16 %v257
      %v700 = vunpack.c.l.b16 %v258
      %v701 = vunpack.c.l.b16 %v259
      %v702 = vunpack.c.l.b16 %v260
      %v703 = vunpack.c.l.b16 %v261
      %v704 = vunpack.c.l.b16 %v262
      %v705 = vunpack.c.l.b16 %v263
      %v706 = vunpack.c.l.b16 %v264
      %v707 = vunpack.c.l.b16 %v265
      %v708 = vunpack.c.l.b16 %v266
      %v709 = vunpack.c.l.b16 %v267
      %v710 = vunpack.c.l.b16 %v268
      %v711 = vunpack.c.l.b16 %v269
      %v712 = vunpack.c.l.b16 %v270
      %v713 = vunpack.c.l.b16 %v271
      %v714 = vunpack.c.l.b16 %v272
      %v715 = vunpack.c.l.b16 %v273
      %v716 = vunpack.c.l.b16 %v274
      %v717 = vunpack.c.l.b16 %v275
      %v718 = vunpack.c.l.b16 %v276
      %v719 = vunpack.c.l.b16 %v277
      %v720 = vunpack.c.l.b16 %v278
      %v721 = vunpack.c.l.b16 %v279
      %v722 = vunpack.c.l.b16 %v280
      %v723 = vunpack.c.l.b16 %v281
      %v724 = vunpack.c.l.b16 %v282
      %v725 = vunpack.c.l.b16 %v283
      %v726 = vunpack.c.l.b16 %v284
      %v727 = vunpack.c.l.b16 %v285
      %v728 = vpack.c.b16 %v697, %v696
      %v729 = vpack.c.b16 %v699, %v698
      %v730 = vpack.c.b16 %v701, %v700
      %v731 = vpack.c.b16 %v703, %v702
      %v732 = vpack.c.b16 %v705, %v704
      %v733 = vpack.c.b16 %v707, %v706
      %v734 = vpack.c.b16 %v709, %v708
      %v735 = vpack.c.b16 %v711, %v710
      %v736 = vpack.c.b16 %v713, %v712
      %v737 = vpack.c.b16 %v715, %v714
      %v738 = vpack.c.b16 %v717, %v716
      %v739 = vpack.c.b16 %v719, %v718
      %v740 = vpack.c.b16 %v721, %v720
      %v741 = vpack.c.b16 %v723, %v722
      %v742 = vpack.c.b16 %v725, %v724
      %v743 = vpack.c.b16 %v727, %v726
      %v746 = vunpack.c.l.b16 %v286
      %v747 = vunpack.c.h.b16 %v286
      %v748 = vunpack.c.l.b16 %v287
      %v749 = vunpack.c.h.b16 %v287
      %v750 = vpack.c.b16 %v748, %v746
      %v751 = vpack.c.b16 %v749, %v747
      %v753 = vsel %vm415, %v728, 0
      %v756 = vsel %vm415, %v729, 0
      %v759 = vsel %vm415, %v730, 0
      %v762 = vsel %vm415, %v731, 0
      %v765 = vsel %vm415, %v732, 0
      %v768 = vsel %vm415, %v733, 0
      %v771 = vsel %vm415, %v734, 0
      %v774 = vsel %vm415, %v735, 0
      %v777 = vsel %vm415, %v736, 0
      %v780 = vsel %vm415, %v737, 0
      %v783 = vsel %vm415, %v738, 0
      %v786 = vsel %vm415, %v739, 0
      %v789 = vsel %vm415, %v740, 0
      %v792 = vsel %vm415, %v741, 0
      %v795 = vsel %vm415, %v742, 0
      %v798 = vsel %vm415, %v743, 0
      %v801 = vsel %vm464, %v750, 0
      %v804 = vsel %vm464, %v751, 0
      %806 = vmatprep.subr.bf16.mxu0 0
      %807 = vmatpush1.bf16.msra.mxu0 0
      %808 = vmatprep.subr.bf16.mxu0 0
      %809 = vmatpush1.bf16.msra.mxu0 0
      %810 = vmatprep.subr.bf16.mxu0 0
      %811 = vmatpush1.bf16.msra.mxu0 0
      %812 = vmatprep.subr.bf16.mxu0 0
      %813 = vmatpush1.bf16.msra.mxu0 0
      %814 = vmatprep.subr.bf16.mxu0 0
      %815 = vmatpush1.bf16.msra.mxu0 0
      %816 = vmatprep.subr.bf16.mxu0 0
      %817 = vmatpush1.bf16.msra.mxu0 0
      %818 = vmatprep.subr.bf16.mxu0 0
      %819 = vmatpush1.bf16.msra.mxu0 0
      %820 = vmatprep.subr.bf16.mxu0 %v804
      %821 = vmatpush1.bf16.msra.mxu0 %v801
      %822 = vmatprep.subr.bf16.mxu0 0
      %823 = vmatpush2.bf16.msra.mxu0 0
      %824 = vmatprep.subr.bf16.mxu0 0
      %825 = vmatpush2.bf16.msra.mxu0 0
      %826 = vmatprep.subr.bf16.mxu0 0
      %827 = vmatpush2.bf16.msra.mxu0 0
      %828 = vmatprep.subr.bf16.mxu0 0
      %829 = vmatpush2.bf16.msra.mxu0 0
      %830 = vmatprep.subr.bf16.mxu0 0
      %831 = vmatpush2.bf16.msra.mxu0 0
      %832 = vmatprep.subr.bf16.mxu0 0
      %833 = vmatpush2.bf16.msra.mxu0 0
      %834 = vmatprep.subr.bf16.mxu0 0
      %835 = vmatpush2.bf16.msra.mxu0 0
      %836 = vmatprep.subr.bf16.mxu0 0
      %837 = vmatpush2.bf16.msra.mxu0 0
      %838 = vmatprep.mubr.bf16.mxu0 0
      %839 = vmatmul.mubr.bf16.gmra.mxu0 %v753
      %v840 = vpop.f32.mrf.mxu0
      %v841 = vadd.f32 %v506, %v840
      %v842 = vpop.f32.mrf.mxu0
      %v843 = vadd.f32 %v508, %v842
      %v844 = vpop.f32.mrf.mxu0
      %v845 = vadd.f32 %v510, %v844
      %v846 = vpop.f32.mrf.mxu0
      %v847 = vadd.f32 %v512, %v846
      %848 = vmatprep.mubr.bf16.mxu0 0
      %849 = vmatmul.mubr.bf16.gmra.mxu0 %v756
      %v850 = vpop.f32.mrf.mxu0
      %v851 = vadd.f32 %v516, %v850
      %v852 = vpop.f32.mrf.mxu0
      %v853 = vadd.f32 %v518, %v852
      %v854 = vpop.f32.mrf.mxu0
      %v855 = vadd.f32 %v520, %v854
      %v856 = vpop.f32.mrf.mxu0
      %v857 = vadd.f32 %v522, %v856
      %858 = vmatprep.mubr.bf16.mxu0 0
      %859 = vmatmul.mubr.bf16.gmra.mxu0 %v759
      %v860 = vpop.f32.mrf.mxu0
      %v861 = vadd.f32 %v526, %v860
      %v862 = vpop.f32.mrf.mxu0
      %v863 = vadd.f32 %v528, %v862
      %v864 = vpop.f32.mrf.mxu0
      %v865 = vadd.f32 %v530, %v864
      %v866 = vpop.f32.mrf.mxu0
      %v867 = vadd.f32 %v532, %v866
      %868 = vmatprep.mubr.bf16.mxu0 0
      %869 = vmatmul.mubr.bf16.gmra.mxu0 %v762
      %v870 = vpop.f32.mrf.mxu0
      %v871 = vadd.f32 %v536, %v870
      %v872 = vpop.f32.mrf.mxu0
      %v873 = vadd.f32 %v538, %v872
      %v874 = vpop.f32.mrf.mxu0
      %v875 = vadd.f32 %v540, %v874
      %v876 = vpop.f32.mrf.mxu0
      %v877 = vadd.f32 %v542, %v876
      %878 = vmatprep.mubr.bf16.mxu0 0
      %879 = vmatmul.mubr.bf16.gmra.mxu0 %v765
      %v880 = vpop.f32.mrf.mxu0
      %v881 = vadd.f32 %v546, %v880
      %v882 = vpop.f32.mrf.mxu0
      %v883 = vadd.f32 %v548, %v882
      %v884 = vpop.f32.mrf.mxu0
      %v885 = vadd.f32 %v550, %v884
      %v886 = vpop.f32.mrf.mxu0
      %v887 = vadd.f32 %v552, %v886
      %888 = vmatprep.mubr.bf16.mxu0 0
      %889 = vmatmul.mubr.bf16.gmra.mxu0 %v768
      %v890 = vpop.f32.mrf.mxu0
      %v891 = vadd.f32 %v556, %v890
      %v892 = vpop.f32.mrf.mxu0
      %v893 = vadd.f32 %v558, %v892
      %v894 = vpop.f32.mrf.mxu0
      %v895 = vadd.f32 %v560, %v894
      %v896 = vpop.f32.mrf.mxu0
      %v897 = vadd.f32 %v562, %v896
      %898 = vmatprep.mubr.bf16.mxu0 0
      %899 = vmatmul.mubr.bf16.gmra.mxu0 %v771
      %v900 = vpop.f32.mrf.mxu0
      %v901 = vadd.f32 %v566, %v900
      %v902 = vpop.f32.mrf.mxu0
      %v903 = vadd.f32 %v568, %v902
      %v904 = vpop.f32.mrf.mxu0
      %v905 = vadd.f32 %v570, %v904
      %v906 = vpop.f32.mrf.mxu0
      %v907 = vadd.f32 %v572, %v906
      %908 = vmatprep.mubr.bf16.mxu0 0
      %909 = vmatmul.mubr.bf16.gmra.mxu0 %v774
      %v910 = vpop.f32.mrf.mxu0
      %v911 = vadd.f32 %v576, %v910
      %v912 = vpop.f32.mrf.mxu0
      %v913 = vadd.f32 %v578, %v912
      %v914 = vpop.f32.mrf.mxu0
      %v915 = vadd.f32 %v580, %v914
      %v916 = vpop.f32.mrf.mxu0
      %v917 = vadd.f32 %v582, %v916
      %918 = vmatprep.mubr.bf16.mxu0 0
      %919 = vmatmul.mubr.bf16.gmra.mxu0 %v777
      %v920 = vpop.f32.mrf.mxu0
      %v921 = vadd.f32 %v586, %v920
      %v922 = vpop.f32.mrf.mxu0
      %v923 = vadd.f32 %v588, %v922
      %v924 = vpop.f32.mrf.mxu0
      %v925 = vadd.f32 %v590, %v924
      %v926 = vpop.f32.mrf.mxu0
      %v927 = vadd.f32 %v592, %v926
      %928 = vmatprep.mubr.bf16.mxu0 0
      %929 = vmatmul.mubr.bf16.gmra.mxu0 %v780
      %v930 = vpop.f32.mrf.mxu0
      %v931 = vadd.f32 %v596, %v930
      %v932 = vpop.f32.mrf.mxu0
      %v933 = vadd.f32 %v598, %v932
      %v934 = vpop.f32.mrf.mxu0
      %v935 = vadd.f32 %v600, %v934
      %v936 = vpop.f32.mrf.mxu0
      %v937 = vadd.f32 %v602, %v936
      %938 = vmatprep.mubr.bf16.mxu0 0
      %939 = vmatmul.mubr.bf16.gmra.mxu0 %v783
      %v940 = vpop.f32.mrf.mxu0
      %v941 = vadd.f32 %v606, %v940
      %v942 = vpop.f32.mrf.mxu0
      %v943 = vadd.f32 %v608, %v942
      %v944 = vpop.f32.mrf.mxu0
      %v945 = vadd.f32 %v610, %v944
      %v946 = vpop.f32.mrf.mxu0
      %v947 = vadd.f32 %v612, %v946
      %948 = vmatprep.mubr.bf16.mxu0 0
      %949 = vmatmul.mubr.bf16.gmra.mxu0 %v786
      %v950 = vpop.f32.mrf.mxu0
      %v951 = vadd.f32 %v616, %v950
      %v952 = vpop.f32.mrf.mxu0
      %v953 = vadd.f32 %v618, %v952
      %v954 = vpop.f32.mrf.mxu0
      %v955 = vadd.f32 %v620, %v954
      %v956 = vpop.f32.mrf.mxu0
      %v957 = vadd.f32 %v622, %v956
      %958 = vmatprep.mubr.bf16.mxu0 0
      %959 = vmatmul.mubr.bf16.gmra.mxu0 %v789
      %v960 = vpop.f32.mrf.mxu0
      %v961 = vadd.f32 %v626, %v960
      %v962 = vpop.f32.mrf.mxu0
      %v963 = vadd.f32 %v628, %v962
      %v964 = vpop.f32.mrf.mxu0
      %v965 = vadd.f32 %v630, %v964
      %v966 = vpop.f32.mrf.mxu0
      %v967 = vadd.f32 %v632, %v966
      %968 = vmatprep.mubr.bf16.mxu0 0
      %969 = vmatmul.mubr.bf16.gmra.mxu0 %v792
      %v970 = vpop.f32.mrf.mxu0
      %v971 = vadd.f32 %v636, %v970
      %v972 = vpop.f32.mrf.mxu0
      %v973 = vadd.f32 %v638, %v972
      %v974 = vpop.f32.mrf.mxu0
      %v975 = vadd.f32 %v640, %v974
      %v976 = vpop.f32.mrf.mxu0
      %v977 = vadd.f32 %v642, %v976
      %978 = vmatprep.mubr.bf16.mxu0 0
      %979 = vmatmul.mubr.bf16.gmra.mxu0 %v795
      %v980 = vpop.f32.mrf.mxu0
      %v981 = vadd.f32 %v646, %v980
      %v982 = vpop.f32.mrf.mxu0
      %v983 = vadd.f32 %v648, %v982
      %v984 = vpop.f32.mrf.mxu0
      %v985 = vadd.f32 %v650, %v984
      %v986 = vpop.f32.mrf.mxu0
      %v987 = vadd.f32 %v652, %v986
      %988 = vmatprep.mubr.bf16.mxu0 0
      %989 = vmatmul.mubr.bf16.gmra.mxu0 %v798
      %v990 = vpop.f32.mrf.mxu0
      %v991 = vadd.f32 %v656, %v990
      %v992 = vpop.f32.mrf.mxu0
      %v993 = vadd.f32 %v658, %v992
      %v994 = vpop.f32.mrf.mxu0
      %v995 = vadd.f32 %v660, %v994
      %v996 = vpop.f32.mrf.mxu0
      %v997 = vadd.f32 %v662, %v996
      %998 = vdwg.mxu0
      %s999 = sadd.s32 %s250, 2
      %s1000 = smul.u32 %s999, 2
      %s1001 = smul.addr %s1000, 4
      %s1002 = scalar_lea.vmem %s226, %s1001
      %v1003 = vld [vmem:[%s1002] sm:$0xf]
      %v1004 = vld [vmem:[%s1002 + $0x4] sm:$0xf]
      %v1005 = vld [vmem:[%s1002 + $0x8] sm:$0xf]
      %v1006 = vld [vmem:[%s1002 + $0xc] sm:$0xf]
      %v1007 = vld [vmem:[%s1002 + $0x10] sm:$0xf]
      %v1008 = vld [vmem:[%s1002 + $0x14] sm:$0xf]
      %v1009 = vld [vmem:[%s1002 + $0x18] sm:$0xf]
      %v1010 = vld [vmem:[%s1002 + $0x1c] sm:$0xf]
      %v1011 = vld [vmem:[%s1002 + $0x20] sm:$0xf]
      %v1012 = vld [vmem:[%s1002 + $0x24] sm:$0xf]
      %v1013 = vld [vmem:[%s1002 + $0x28] sm:$0xf]
      %v1014 = vld [vmem:[%s1002 + $0x2c] sm:$0xf]
      %v1015 = vld [vmem:[%s1002 + $0x30] sm:$0xf]
      %v1016 = vld [vmem:[%s1002 + $0x34] sm:$0xf]
      %v1017 = vld [vmem:[%s1002 + $0x38] sm:$0xf]
      %v1018 = vld [vmem:[%s1002 + $0x3c] sm:$0xf]
      %v1019 = vld [vmem:[%s1002 + $0x40] sm:$0xf]
      %v1020 = vld [vmem:[%s1002 + $0x44] sm:$0xf]
      %v1021 = vld [vmem:[%s1002 + $0x48] sm:$0xf]
      %v1022 = vld [vmem:[%s1002 + $0x4c] sm:$0xf]
      %v1023 = vld [vmem:[%s1002 + $0x50] sm:$0xf]
      %v1024 = vld [vmem:[%s1002 + $0x54] sm:$0xf]
      %v1025 = vld [vmem:[%s1002 + $0x58] sm:$0xf]
      %v1026 = vld [vmem:[%s1002 + $0x5c] sm:$0xf]
      %v1027 = vld [vmem:[%s1002 + $0x60] sm:$0xf]
      %v1028 = vld [vmem:[%s1002 + $0x64] sm:$0xf]
      %v1029 = vld [vmem:[%s1002 + $0x68] sm:$0xf]
      %v1030 = vld [vmem:[%s1002 + $0x6c] sm:$0xf]
      %v1031 = vld [vmem:[%s1002 + $0x70] sm:$0xf]
      %v1032 = vld [vmem:[%s1002 + $0x74] sm:$0xf]
      %v1033 = vld [vmem:[%s1002 + $0x78] sm:$0xf]
      %v1034 = vld [vmem:[%s1002 + $0x7c] sm:$0xf]
      %s1035 = scalar_lea.vmem %s1, 32
      %v1036 = vld [vmem:[%s1035] sm:$0xff]
      %v1037 = vld [vmem:[%s1035 + $0x8] sm:$0x33]
      %v1070 = vunpack.c.l.b16 %v1003
      %v1071 = vunpack.c.l.b16 %v1004
      %v1072 = vunpack.c.l.b16 %v1005
      %v1073 = vunpack.c.l.b16 %v1006
      %v1074 = vunpack.c.l.b16 %v1007
      %v1075 = vunpack.c.l.b16 %v1008
      %v1076 = vunpack.c.l.b16 %v1009
      %v1077 = vunpack.c.l.b16 %v1010
      %v1078 = vunpack.c.l.b16 %v1011
      %v1079 = vunpack.c.l.b16 %v1012
      %v1080 = vunpack.c.l.b16 %v1013
      %v1081 = vunpack.c.l.b16 %v1014
      %v1082 = vunpack.c.l.b16 %v1015
      %v1083 = vunpack.c.l.b16 %v1016
      %v1084 = vunpack.c.l.b16 %v1017
      %v1085 = vunpack.c.l.b16 %v1018
      %v1086 = vunpack.c.l.b16 %v1019
      %v1087 = vunpack.c.l.b16 %v1020
      %v1088 = vunpack.c.l.b16 %v1021
      %v1089 = vunpack.c.l.b16 %v1022
      %v1090 = vunpack.c.l.b16 %v1023
      %v1091 = vunpack.c.l.b16 %v1024
      %v1092 = vunpack.c.l.b16 %v1025
      %v1093 = vunpack.c.l.b16 %v1026
      %v1094 = vunpack.c.l.b16 %v1027
      %v1095 = vunpack.c.l.b16 %v1028
      %v1096 = vunpack.c.l.b16 %v1029
      %v1097 = vunpack.c.l.b16 %v1030
      %v1098 = vunpack.c.l.b16 %v1031
      %v1099 = vunpack.c.l.b16 %v1032
      %v1100 = vunpack.c.l.b16 %v1033
      %v1101 = vunpack.c.l.b16 %v1034
      %v1102 = vpack.c.b16 %v1071, %v1070
      %v1103 = vpack.c.b16 %v1073, %v1072
      %v1104 = vpack.c.b16 %v1075, %v1074
      %v1105 = vpack.c.b16 %v1077, %v1076
      %v1106 = vpack.c.b16 %v1079, %v1078
      %v1107 = vpack.c.b16 %v1081, %v1080
      %v1108 = vpack.c.b16 %v1083, %v1082
      %v1109 = vpack.c.b16 %v1085, %v1084
      %v1110 = vpack.c.b16 %v1087, %v1086
      %v1111 = vpack.c.b16 %v1089, %v1088
      %v1112 = vpack.c.b16 %v1091, %v1090
      %v1113 = vpack.c.b16 %v1093, %v1092
      %v1114 = vpack.c.b16 %v1095, %v1094
      %v1115 = vpack.c.b16 %v1097, %v1096
      %v1116 = vpack.c.b16 %v1099, %v1098
      %v1117 = vpack.c.b16 %v1101, %v1100
      %v1120 = vunpack.c.l.b16 %v1036
      %v1121 = vunpack.c.h.b16 %v1036
      %v1122 = vunpack.c.l.b16 %v1037
      %v1123 = vunpack.c.h.b16 %v1037
      %v1124 = vpack.c.b16 %v1122, %v1120
      %v1125 = vpack.c.b16 %v1123, %v1121
      %v1127 = vsel %vm415, %v1102, 0
      %v1130 = vsel %vm415, %v1103, 0
      %v1133 = vsel %vm415, %v1104, 0
      %v1136 = vsel %vm415, %v1105, 0
      %v1139 = vsel %vm415, %v1106, 0
      %v1142 = vsel %vm415, %v1107, 0
      %v1145 = vsel %vm415, %v1108, 0
      %v1148 = vsel %vm415, %v1109, 0
      %v1151 = vsel %vm415, %v1110, 0
      %v1154 = vsel %vm415, %v1111, 0
      %v1157 = vsel %vm415, %v1112, 0
      %v1160 = vsel %vm415, %v1113, 0
      %v1163 = vsel %vm415, %v1114, 0
      %v1166 = vsel %vm415, %v1115, 0
      %v1169 = vsel %vm415, %v1116, 0
      %v1172 = vsel %vm415, %v1117, 0
      %v1175 = vsel %vm464, %v1124, 0
      %v1178 = vsel %vm464, %v1125, 0
      %1180 = vmatprep.subr.bf16.mxu0 0
      %1181 = vmatpush1.bf16.msra.mxu0 0
      %1182 = vmatprep.subr.bf16.mxu0 0
      %1183 = vmatpush1.bf16.msra.mxu0 0
      %1184 = vmatprep.subr.bf16.mxu0 0
      %1185 = vmatpush1.bf16.msra.mxu0 0
      %1186 = vmatprep.subr.bf16.mxu0 0
      %1187 = vmatpush1.bf16.msra.mxu0 0
      %1188 = vmatprep.subr.bf16.mxu0 0
      %1189 = vmatpush1.bf16.msra.mxu0 0
      %1190 = vmatprep.subr.bf16.mxu0 0
      %1191 = vmatpush1.bf16.msra.mxu0 0
      %1192 = vmatprep.subr.bf16.mxu0 0
      %1193 = vmatpush1.bf16.msra.mxu0 0
      %1194 = vmatprep.subr.bf16.mxu0 %v1178
      %1195 = vmatpush1.bf16.msra.mxu0 %v1175
      %1196 = vmatprep.subr.bf16.mxu0 0
      %1197 = vmatpush2.bf16.msra.mxu0 0
      %1198 = vmatprep.subr.bf16.mxu0 0
      %1199 = vmatpush2.bf16.msra.mxu0 0
      %1200 = vmatprep.subr.bf16.mxu0 0
      %1201 = vmatpush2.bf16.msra.mxu0 0
      %1202 = vmatprep.subr.bf16.mxu0 0
      %1203 = vmatpush2.bf16.msra.mxu0 0
      %1204 = vmatprep.subr.bf16.mxu0 0
      %1205 = vmatpush2.bf16.msra.mxu0 0
      %1206 = vmatprep.subr.bf16.mxu0 0
      %1207 = vmatpush2.bf16.msra.mxu0 0
      %1208 = vmatprep.subr.bf16.mxu0 0
      %1209 = vmatpush2.bf16.msra.mxu0 0
      %1210 = vmatprep.subr.bf16.mxu0 0
      %1211 = vmatpush2.bf16.msra.mxu0 0
      %1212 = vmatprep.mubr.bf16.mxu0 0
      %1213 = vmatmul.mubr.bf16.gmra.mxu0 %v1127
      %v1214 = vpop.f32.mrf.mxu0
      %v1215 = vadd.f32 0.0, %v1214
      %v1216 = vpop.f32.mrf.mxu0
      %v1217 = vadd.f32 0.0, %v1216
      %v1218 = vpop.f32.mrf.mxu0
      %v1219 = vadd.f32 0.0, %v1218
      %v1220 = vpop.f32.mrf.mxu0
      %v1221 = vadd.f32 0.0, %v1220
      %1222 = vmatprep.mubr.bf16.mxu0 0
      %1223 = vmatmul.mubr.bf16.gmra.mxu0 %v1130
      %v1224 = vpop.f32.mrf.mxu0
      %v1225 = vadd.f32 0.0, %v1224
      %v1226 = vpop.f32.mrf.mxu0
      %v1227 = vadd.f32 0.0, %v1226
      %v1228 = vpop.f32.mrf.mxu0
      %v1229 = vadd.f32 0.0, %v1228
      %v1230 = vpop.f32.mrf.mxu0
      %v1231 = vadd.f32 0.0, %v1230
      %1232 = vmatprep.mubr.bf16.mxu0 0
      %1233 = vmatmul.mubr.bf16.gmra.mxu0 %v1133
      %v1234 = vpop.f32.mrf.mxu0
      %v1235 = vadd.f32 0.0, %v1234
      %v1236 = vpop.f32.mrf.mxu0
      %v1237 = vadd.f32 0.0, %v1236
      %v1238 = vpop.f32.mrf.mxu0
      %v1239 = vadd.f32 0.0, %v1238
      %v1240 = vpop.f32.mrf.mxu0
      %v1241 = vadd.f32 0.0, %v1240
      %1242 = vmatprep.mubr.bf16.mxu0 0
      %1243 = vmatmul.mubr.bf16.gmra.mxu0 %v1136
      %v1244 = vpop.f32.mrf.mxu0
      %v1245 = vadd.f32 0.0, %v1244
      %v1246 = vpop.f32.mrf.mxu0
      %v1247 = vadd.f32 0.0, %v1246
      %v1248 = vpop.f32.mrf.mxu0
      %v1249 = vadd.f32 0.0, %v1248
      %v1250 = vpop.f32.mrf.mxu0
      %v1251 = vadd.f32 0.0, %v1250
      %1252 = vmatprep.mubr.bf16.mxu0 0
      %1253 = vmatmul.mubr.bf16.gmra.mxu0 %v1139
      %v1254 = vpop.f32.mrf.mxu0
      %v1255 = vadd.f32 0.0, %v1254
      %v1256 = vpop.f32.mrf.mxu0
      %v1257 = vadd.f32 0.0, %v1256
      %v1258 = vpop.f32.mrf.mxu0
      %v1259 = vadd.f32 0.0, %v1258
      %v1260 = vpop.f32.mrf.mxu0
      %v1261 = vadd.f32 0.0, %v1260
      %1262 = vmatprep.mubr.bf16.mxu0 0
      %1263 = vmatmul.mubr.bf16.gmra.mxu0 %v1142
      %v1264 = vpop.f32.mrf.mxu0
      %v1265 = vadd.f32 0.0, %v1264
      %v1266 = vpop.f32.mrf.mxu0
      %v1267 = vadd.f32 0.0, %v1266
      %v1268 = vpop.f32.mrf.mxu0
      %v1269 = vadd.f32 0.0, %v1268
      %v1270 = vpop.f32.mrf.mxu0
      %v1271 = vadd.f32 0.0, %v1270
      %1272 = vmatprep.mubr.bf16.mxu0 0
      %1273 = vmatmul.mubr.bf16.gmra.mxu0 %v1145
      %v1274 = vpop.f32.mrf.mxu0
      %v1275 = vadd.f32 0.0, %v1274
      %v1276 = vpop.f32.mrf.mxu0
      %v1277 = vadd.f32 0.0, %v1276
      %v1278 = vpop.f32.mrf.mxu0
      %v1279 = vadd.f32 0.0, %v1278
      %v1280 = vpop.f32.mrf.mxu0
      %v1281 = vadd.f32 0.0, %v1280
      %1282 = vmatprep.mubr.bf16.mxu0 0
      %1283 = vmatmul.mubr.bf16.gmra.mxu0 %v1148
      %v1284 = vpop.f32.mrf.mxu0
      %v1285 = vadd.f32 0.0, %v1284
      %v1286 = vpop.f32.mrf.mxu0
      %v1287 = vadd.f32 0.0, %v1286
      %v1288 = vpop.f32.mrf.mxu0
      %v1289 = vadd.f32 0.0, %v1288
      %v1290 = vpop.f32.mrf.mxu0
      %v1291 = vadd.f32 0.0, %v1290
      %1292 = vmatprep.mubr.bf16.mxu0 0
      %1293 = vmatmul.mubr.bf16.gmra.mxu0 %v1151
      %v1294 = vpop.f32.mrf.mxu0
      %v1295 = vadd.f32 0.0, %v1294
      %v1296 = vpop.f32.mrf.mxu0
      %v1297 = vadd.f32 0.0, %v1296
      %v1298 = vpop.f32.mrf.mxu0
      %v1299 = vadd.f32 0.0, %v1298
      %v1300 = vpop.f32.mrf.mxu0
      %v1301 = vadd.f32 0.0, %v1300
      %1302 = vmatprep.mubr.bf16.mxu0 0
      %1303 = vmatmul.mubr.bf16.gmra.mxu0 %v1154
      %v1304 = vpop.f32.mrf.mxu0
      %v1305 = vadd.f32 0.0, %v1304
      %v1306 = vpop.f32.mrf.mxu0
      %v1307 = vadd.f32 0.0, %v1306
      %v1308 = vpop.f32.mrf.mxu0
      %v1309 = vadd.f32 0.0, %v1308
      %v1310 = vpop.f32.mrf.mxu0
      %v1311 = vadd.f32 0.0, %v1310
      %1312 = vmatprep.mubr.bf16.mxu0 0
      %1313 = vmatmul.mubr.bf16.gmra.mxu0 %v1157
      %v1314 = vpop.f32.mrf.mxu0
      %v1315 = vadd.f32 0.0, %v1314
      %v1316 = vpop.f32.mrf.mxu0
      %v1317 = vadd.f32 0.0, %v1316
      %v1318 = vpop.f32.mrf.mxu0
      %v1319 = vadd.f32 0.0, %v1318
      %v1320 = vpop.f32.mrf.mxu0
      %v1321 = vadd.f32 0.0, %v1320
      %1322 = vmatprep.mubr.bf16.mxu0 0
      %1323 = vmatmul.mubr.bf16.gmra.mxu0 %v1160
      %v1324 = vpop.f32.mrf.mxu0
      %v1325 = vadd.f32 0.0, %v1324
      %v1326 = vpop.f32.mrf.mxu0
      %v1327 = vadd.f32 0.0, %v1326
      %v1328 = vpop.f32.mrf.mxu0
      %v1329 = vadd.f32 0.0, %v1328
      %v1330 = vpop.f32.mrf.mxu0
      %v1331 = vadd.f32 0.0, %v1330
      %1332 = vmatprep.mubr.bf16.mxu0 0
      %1333 = vmatmul.mubr.bf16.gmra.mxu0 %v1163
      %v1334 = vpop.f32.mrf.mxu0
      %v1335 = vadd.f32 0.0, %v1334
      %v1336 = vpop.f32.mrf.mxu0
      %v1337 = vadd.f32 0.0, %v1336
      %v1338 = vpop.f32.mrf.mxu0
      %v1339 = vadd.f32 0.0, %v1338
      %v1340 = vpop.f32.mrf.mxu0
      %v1341 = vadd.f32 0.0, %v1340
      %1342 = vmatprep.mubr.bf16.mxu0 0
      %1343 = vmatmul.mubr.bf16.gmra.mxu0 %v1166
      %v1344 = vpop.f32.mrf.mxu0
      %v1345 = vadd.f32 0.0, %v1344
      %v1346 = vpop.f32.mrf.mxu0
      %v1347 = vadd.f32 0.0, %v1346
      %v1348 = vpop.f32.mrf.mxu0
      %v1349 = vadd.f32 0.0, %v1348
      %v1350 = vpop.f32.mrf.mxu0
      %v1351 = vadd.f32 0.0, %v1350
      %1352 = vmatprep.mubr.bf16.mxu0 0
      %1353 = vmatmul.mubr.bf16.gmra.mxu0 %v1169
      %v1354 = vpop.f32.mrf.mxu0
      %v1355 = vadd.f32 0.0, %v1354
      %v1356 = vpop.f32.mrf.mxu0
      %v1357 = vadd.f32 0.0, %v1356
      %v1358 = vpop.f32.mrf.mxu0
      %v1359 = vadd.f32 0.0, %v1358
      %v1360 = vpop.f32.mrf.mxu0
      %v1361 = vadd.f32 0.0, %v1360
      %1362 = vmatprep.mubr.bf16.mxu0 0
      %1363 = vmatmul.mubr.bf16.gmra.mxu0 %v1172
      %v1364 = vpop.f32.mrf.mxu0
      %v1365 = vadd.f32 0.0, %v1364
      %v1366 = vpop.f32.mrf.mxu0
      %v1367 = vadd.f32 0.0, %v1366
      %v1368 = vpop.f32.mrf.mxu0
      %v1369 = vadd.f32 0.0, %v1368
      %v1370 = vpop.f32.mrf.mxu0
      %v1371 = vadd.f32 0.0, %v1370
      %1372 = vdwg.mxu0
      %v1373 = vadd.f32 %v841, %v1215
      %v1374 = vadd.f32 %v843, %v1217
      %v1375 = vadd.f32 %v845, %v1219
      %v1376 = vadd.f32 %v847, %v1221
      %v1377 = vadd.f32 %v851, %v1225
      %v1378 = vadd.f32 %v853, %v1227
      %v1379 = vadd.f32 %v855, %v1229
      %v1380 = vadd.f32 %v857, %v1231
      %v1381 = vadd.f32 %v861, %v1235
      %v1382 = vadd.f32 %v863, %v1237
      %v1383 = vadd.f32 %v865, %v1239
      %v1384 = vadd.f32 %v867, %v1241
      %v1385 = vadd.f32 %v871, %v1245
      %v1386 = vadd.f32 %v873, %v1247
      %v1387 = vadd.f32 %v875, %v1249
      %v1388 = vadd.f32 %v877, %v1251
      %v1389 = vadd.f32 %v881, %v1255
      %v1390 = vadd.f32 %v883, %v1257
      %v1391 = vadd.f32 %v885, %v1259
      %v1392 = vadd.f32 %v887, %v1261
      %v1393 = vadd.f32 %v891, %v1265
      %v1394 = vadd.f32 %v893, %v1267
      %v1395 = vadd.f32 %v895, %v1269
      %v1396 = vadd.f32 %v897, %v1271
      %v1397 = vadd.f32 %v901, %v1275
      %v1398 = vadd.f32 %v903, %v1277
      %v1399 = vadd.f32 %v905, %v1279
      %v1400 = vadd.f32 %v907, %v1281
      %v1401 = vadd.f32 %v911, %v1285
      %v1402 = vadd.f32 %v913, %v1287
      %v1403 = vadd.f32 %v915, %v1289
      %v1404 = vadd.f32 %v917, %v1291
      %v1405 = vadd.f32 %v921, %v1295
      %v1406 = vadd.f32 %v923, %v1297
      %v1407 = vadd.f32 %v925, %v1299
      %v1408 = vadd.f32 %v927, %v1301
      %v1409 = vadd.f32 %v931, %v1305
      %v1410 = vadd.f32 %v933, %v1307
      %v1411 = vadd.f32 %v935, %v1309
      %v1412 = vadd.f32 %v937, %v1311
      %v1413 = vadd.f32 %v941, %v1315
      %v1414 = vadd.f32 %v943, %v1317
      %v1415 = vadd.f32 %v945, %v1319
      %v1416 = vadd.f32 %v947, %v1321
      %v1417 = vadd.f32 %v951, %v1325
      %v1418 = vadd.f32 %v953, %v1327
      %v1419 = vadd.f32 %v955, %v1329
      %v1420 = vadd.f32 %v957, %v1331
      %v1421 = vadd.f32 %v961, %v1335
      %v1422 = vadd.f32 %v963, %v1337
      %v1423 = vadd.f32 %v965, %v1339
      %v1424 = vadd.f32 %v967, %v1341
      %v1425 = vadd.f32 %v971, %v1345
      %v1426 = vadd.f32 %v973, %v1347
      %v1427 = vadd.f32 %v975, %v1349
      %v1428 = vadd.f32 %v977, %v1351
      %v1429 = vadd.f32 %v981, %v1355
      %v1430 = vadd.f32 %v983, %v1357
      %v1431 = vadd.f32 %v985, %v1359
      %v1432 = vadd.f32 %v987, %v1361
      %v1433 = vadd.f32 %v991, %v1365
      %v1434 = vadd.f32 %v993, %v1367
      %v1435 = vadd.f32 %v995, %v1369
      %v1436 = vadd.f32 %v997, %v1371
      %v1437 = vld [vmem:[%s2] sm:$0x3]
      %v1439 = vlaneseq
      %v1440 = vshrl.u32 %v1439, 7
      %v1441 = vsub.s32 0, %v1440
      %v1442 = vrot.slane %v1437, %v1441
      %v1443 = vlaneseq
      %v1444 = vshrl.u32 %v1443, 7
      %v1445 = vsub.s32 1, %v1444
      %v1446 = vrot.slane %v1437, %v1445
      %v1449 = vadd.f32 %v1373, %v1442
      %v1450 = vadd.f32 %v1374, %v1446
      %v1451 = vadd.f32 %v1375, %v1442
      %v1452 = vadd.f32 %v1376, %v1446
      %v1453 = vadd.f32 %v1377, %v1442
      %v1454 = vadd.f32 %v1378, %v1446
      %v1455 = vadd.f32 %v1379, %v1442
      %v1456 = vadd.f32 %v1380, %v1446
      %v1457 = vadd.f32 %v1381, %v1442
      %v1458 = vadd.f32 %v1382, %v1446
      %v1459 = vadd.f32 %v1383, %v1442
      %v1460 = vadd.f32 %v1384, %v1446
      %v1461 = vadd.f32 %v1385, %v1442
      %v1462 = vadd.f32 %v1386, %v1446
      %v1463 = vadd.f32 %v1387, %v1442
      %v1464 = vadd.f32 %v1388, %v1446
      %v1465 = vadd.f32 %v1389, %v1442
      %v1466 = vadd.f32 %v1390, %v1446
      %v1467 = vadd.f32 %v1391, %v1442
      %v1468 = vadd.f32 %v1392, %v1446
      %v1469 = vadd.f32 %v1393, %v1442
      %v1470 = vadd.f32 %v1394, %v1446
      %v1471 = vadd.f32 %v1395, %v1442
      %v1472 = vadd.f32 %v1396, %v1446
      %v1473 = vadd.f32 %v1397, %v1442
      %v1474 = vadd.f32 %v1398, %v1446
      %v1475 = vadd.f32 %v1399, %v1442
      %v1476 = vadd.f32 %v1400, %v1446
      %v1477 = vadd.f32 %v1401, %v1442
      %v1478 = vadd.f32 %v1402, %v1446
      %v1479 = vadd.f32 %v1403, %v1442
      %v1480 = vadd.f32 %v1404, %v1446
      %v1481 = vadd.f32 %v1405, %v1442
      %v1482 = vadd.f32 %v1406, %v1446
      %v1483 = vadd.f32 %v1407, %v1442
      %v1484 = vadd.f32 %v1408, %v1446
      %v1485 = vadd.f32 %v1409, %v1442
      %v1486 = vadd.f32 %v1410, %v1446
      %v1487 = vadd.f32 %v1411, %v1442
      %v1488 = vadd.f32 %v1412, %v1446
      %v1489 = vadd.f32 %v1413, %v1442
      %v1490 = vadd.f32 %v1414, %v1446
      %v1491 = vadd.f32 %v1415, %v1442
      %v1492 = vadd.f32 %v1416, %v1446
      %v1493 = vadd.f32 %v1417, %v1442
      %v1494 = vadd.f32 %v1418, %v1446
      %v1495 = vadd.f32 %v1419, %v1442
      %v1496 = vadd.f32 %v1420, %v1446
      %v1497 = vadd.f32 %v1421, %v1442
      %v1498 = vadd.f32 %v1422, %v1446
      %v1499 = vadd.f32 %v1423, %v1442
      %v1500 = vadd.f32 %v1424, %v1446
      %v1501 = vadd.f32 %v1425, %v1442
      %v1502 = vadd.f32 %v1426, %v1446
      %v1503 = vadd.f32 %v1427, %v1442
      %v1504 = vadd.f32 %v1428, %v1446
      %v1505 = vadd.f32 %v1429, %v1442
      %v1506 = vadd.f32 %v1430, %v1446
      %v1507 = vadd.f32 %v1431, %v1442
      %v1508 = vadd.f32 %v1432, %v1446
      %v1509 = vadd.f32 %v1433, %v1442
      %v1510 = vadd.f32 %v1434, %v1446
      %v1511 = vadd.f32 %v1435, %v1442
      %v1512 = vadd.f32 %v1436, %v1446
      %1513 = vst [vmem:[%s236] sm:$0xff] %v1449
      %1514 = vst [vmem:[%s236 + $0x8] sm:$0xff] %v1451
      %1515 = vst [vmem:[%s236 + $0x10] sm:$0xff] %v1453
      %1516 = vst [vmem:[%s236 + $0x18] sm:$0xff] %v1455
      %1517 = vst [vmem:[%s236 + $0x20] sm:$0xff] %v1457
      %1518 = vst [vmem:[%s236 + $0x28] sm:$0xff] %v1459
      %1519 = vst [vmem:[%s236 + $0x30] sm:$0xff] %v1461
      %1520 = vst [vmem:[%s236 + $0x38] sm:$0xff] %v1463
      %1521 = vst [vmem:[%s236 + $0x40] sm:$0xff] %v1465
      %1522 = vst [vmem:[%s236 + $0x48] sm:$0xff] %v1467
      %1523 = vst [vmem:[%s236 + $0x50] sm:$0xff] %v1469
      %1524 = vst [vmem:[%s236 + $0x58] sm:$0xff] %v1471
      %1525 = vst [vmem:[%s236 + $0x60] sm:$0xff] %v1473
      %1526 = vst [vmem:[%s236 + $0x68] sm:$0xff] %v1475
      %1527 = vst [vmem:[%s236 + $0x70] sm:$0xff] %v1477
      %1528 = vst [vmem:[%s236 + $0x78] sm:$0xff] %v1479
      %1529 = vst [vmem:[%s236 + $0x80] sm:$0xff] %v1481
      %1530 = vst [vmem:[%s236 + $0x88] sm:$0xff] %v1483
      %1531 = vst [vmem:[%s236 + $0x90] sm:$0xff] %v1485
      %1532 = vst [vmem:[%s236 + $0x98] sm:$0xff] %v1487
      %1533 = vst [vmem:[%s236 + $0xa0] sm:$0xff] %v1489
      %1534 = vst [vmem:[%s236 + $0xa8] sm:$0xff] %v1491
      %1535 = vst [vmem:[%s236 + $0xb0] sm:$0xff] %v1493
      %1536 = vst [vmem:[%s236 + $0xb8] sm:$0xff] %v1495
      %1537 = vst [vmem:[%s236 + $0xc0] sm:$0xff] %v1497
      %1538 = vst [vmem:[%s236 + $0xc8] sm:$0xff] %v1499
      %1539 = vst [vmem:[%s236 + $0xd0] sm:$0xff] %v1501
      %1540 = vst [vmem:[%s236 + $0xd8] sm:$0xff] %v1503
      %1541 = vst [vmem:[%s236 + $0xe0] sm:$0xff] %v1505
      %1542 = vst [vmem:[%s236 + $0xe8] sm:$0xff] %v1507
      %1543 = vst [vmem:[%s236 + $0xf0] sm:$0xff] %v1509
      %1544 = vst [vmem:[%s236 + $0xf8] sm:$0xff] %v1511
      %1545 = vst [vmem:[%s247] sm:$0xff] %v1450
      %1546 = vst [vmem:[%s247 + $0x8] sm:$0xff] %v1452
      %1547 = vst [vmem:[%s247 + $0x10] sm:$0xff] %v1454
      %1548 = vst [vmem:[%s247 + $0x18] sm:$0xff] %v1456
      %1549 = vst [vmem:[%s247 + $0x20] sm:$0xff] %v1458
      %1550 = vst [vmem:[%s247 + $0x28] sm:$0xff] %v1460
      %1551 = vst [vmem:[%s247 + $0x30] sm:$0xff] %v1462
      %1552 = vst [vmem:[%s247 + $0x38] sm:$0xff] %v1464
      %1553 = vst [vmem:[%s247 + $0x40] sm:$0xff] %v1466
      %1554 = vst [vmem:[%s247 + $0x48] sm:$0xff] %v1468
      %1555 = vst [vmem:[%s247 + $0x50] sm:$0xff] %v1470
      %1556 = vst [vmem:[%s247 + $0x58] sm:$0xff] %v1472
      %1557 = vst [vmem:[%s247 + $0x60] sm:$0xff] %v1474
      %1558 = vst [vmem:[%s247 + $0x68] sm:$0xff] %v1476
      %1559 = vst [vmem:[%s247 + $0x70] sm:$0xff] %v1478
      %1560 = vst [vmem:[%s247 + $0x78] sm:$0xff] %v1480
      %1561 = vst [vmem:[%s247 + $0x80] sm:$0xff] %v1482
      %1562 = vst [vmem:[%s247 + $0x88] sm:$0xff] %v1484
      %1563 = vst [vmem:[%s247 + $0x90] sm:$0xff] %v1486
      %1564 = vst [vmem:[%s247 + $0x98] sm:$0xff] %v1488
      %1565 = vst [vmem:[%s247 + $0xa0] sm:$0xff] %v1490
      %1566 = vst [vmem:[%s247 + $0xa8] sm:$0xff] %v1492
      %1567 = vst [vmem:[%s247 + $0xb0] sm:$0xff] %v1494
      %1568 = vst [vmem:[%s247 + $0xb8] sm:$0xff] %v1496
      %1569 = vst [vmem:[%s247 + $0xc0] sm:$0xff] %v1498
      %1570 = vst [vmem:[%s247 + $0xc8] sm:$0xff] %v1500
      %1571 = vst [vmem:[%s247 + $0xd0] sm:$0xff] %v1502
      %1572 = vst [vmem:[%s247 + $0xd8] sm:$0xff] %v1504
      %1573 = vst [vmem:[%s247 + $0xe0] sm:$0xff] %v1506
      %1574 = vst [vmem:[%s247 + $0xe8] sm:$0xff] %v1508
      %1575 = vst [vmem:[%s247 + $0xf0] sm:$0xff] %v1510
      %1576 = vst [vmem:[%s247 + $0xf8] sm:$0xff] %v1512
      %s1577 = smul.u32 16, %s21
      %p1578 = scmp.lt.s32.totalorder %s20, 1
      %s1579 = scalar_select %p1578, %s20, 1
      %p1580 = scmp.lt.s32.totalorder %s1577, 15
      %s1581 = scalar_select %p1580, %s1577, 15
      %s1582 = smul.addr %s1581, 2
      %s1583 = smul.addr %s1579, 32
      %s1584 = sadd.s32 %s1582, %s1583
      %s1585 = smul.addr %s1584, 8
      %s1586 = scalar_lea.vmem %s3, %s1585
      %s1587 = smul.u32 16, %s21
      %p1588 = scmp.lt.s32.totalorder %s20, 1
      %s1589 = scalar_select %p1588, %s20, 1
      %p1590 = scmp.lt.s32.totalorder %s1587, 15
      %s1591 = scalar_select %p1590, %s1587, 15
      %s1592 = smul.addr %s1591, 2
      %s1593 = smul.addr %s1589, 32
      %s1594 = sadd.s32 %s1592, %s1593
      %s1595 = smul.addr %s1594, 8
      %s1596 = scalar_lea.vmem %s4, %s1595
      // Predicated region
      $region33: #{_level_forward.1} parent=31 // pred_check
        %p1597 = pneg %p116
      $region34: #{_level_forward.1} parent=31 // pred_check_branch
        %1599 = sbr.rel (%p1597) target = $region36
      $region35: #{_level_forward.1} parent=31 // pred_region
        %s1600 = smul.u32 16, %s21
      $region36: #{_level_forward.1} parent=31 // pred_fallthru
        _
      // Predicated region
      $region37: #{_level_forward.1} parent=31 // pred_check
        %p1601 = pneg %p144
      $region38: #{_level_forward.1} parent=31 // pred_check_branch
        %1603 = sbr.rel (%p1601) target = $region40
      $region39: #{_level_forward.1} parent=31 // pred_region
        %s1604 = smul.u32 16, %s21
      $region40: #{_level_forward.1} parent=31 // pred_fallthru
        _
    $region32: #{_level_forward.1} parent=5 // pred_fallthru
      _
    %p1605 = scmp.le.s32.totalorder 2, %s11
    // Predicated region
    $region41: #{_level_forward.1} parent=5 // pred_check
      %p1606 = pneg %p1605
    $region42: #{_level_forward.1} parent=5 // pred_check_branch
      %1608 = sbr.rel (%p1606) target = $region44
    $region43: #{_level_forward.1} parent=5 // pred_region
      %s1609 = ssub.s32 %s11, 2
      // Predicated region
      $region45: #{_level_forward.1} parent=43 // pred_check
        %p1610 = pneg %p122
      $region46: #{_level_forward.1} parent=43 // pred_check_branch
        %1612 = sbr.rel (%p1610) target = $region48
      $region47: #{_level_forward.1} parent=43 // pred_region
        %s1613 = smul.u32 16, %s23
        %p1614 = scmp.lt.s32.totalorder %s22, 1
        %s1615 = scalar_select %p1614, %s22, 1
        %p1616 = scmp.lt.s32.totalorder %s1613, 15
        %s1617 = scalar_select %p1616, %s1613, 15
        %s1618 = smul.addr %s1617, 2
        %s1619 = smul.addr %s1615, 32
        %s1620 = sadd.s32 %s1618, %s1619
        %s1621 = smul.addr %s1620, 8
        %s1622 = scalar_lea.vmem %s3, %s1621
      $region48: #{_level_forward.1} parent=43 // pred_fallthru
        _
      // Predicated region
      $region49: #{_level_forward.1} parent=43 // pred_check
        %p1623 = pneg %p150
      $region50: #{_level_forward.1} parent=43 // pred_check_branch
        %1625 = sbr.rel (%p1623) target = $region52
      $region51: #{_level_forward.1} parent=43 // pred_region
        %s1626 = smul.u32 16, %s23
        %p1627 = scmp.lt.s32.totalorder %s22, 1
        %s1628 = scalar_select %p1627, %s22, 1
        %p1629 = scmp.lt.s32.totalorder %s1626, 15
        %s1630 = scalar_select %p1629, %s1626, 15
        %s1631 = smul.addr %s1630, 2
        %s1632 = smul.addr %s1628, 32
        %s1633 = sadd.s32 %s1631, %s1632
        %s1634 = smul.addr %s1633, 8
        %s1635 = scalar_lea.vmem %s4, %s1634
      $region52: #{_level_forward.1} parent=43 // pred_fallthru
        _
    $region44: #{_level_forward.1} parent=5 // pred_fallthru
      _
  $region6: #{_level_forward.1} parent=0 // loop_footer
    %s15 = sadd.s32 1, %s11
  $region7: #{_level_forward.1} parent=0 // loop_footer_branch
    %10 = sbr.rel target = $region3
  $region8: #{_level_forward.1} parent=0 // loop_exit
    _

</llo_original>
